<compile_context>
chip_gen: v7x
topology: tpu7x:2x2x1
jax: 0.10.0
libtpu: 0.0.40
codegen_flags: <defaults>
</compile_context>

<pallas_src>
import jax
import jax.numpy as jnp
from jax.experimental import pallas as pl
from jax.experimental.pallas import tpu as pltpu


def _round_up(x, m):
    return ((x + m - 1) // m) * m


def vae_rbf_kernel(
    # streamed per batch block
    x_ref,        # (TB, D_in)  f32
    eps_ref,      # (TB, d_z)   f32   reparameterization noise
    # VMEM-resident weights (constant block index across the grid)
    w1_ref,       # (D_in, H)   bf16
    b1_ref,       # (1, H)      f32
    wmuv_ref,     # (H, 2*d_z)  bf16  fused [wmu | wlv]
    bmuv_ref,     # (1, 2*d_z)  f32   fused [bmu | blv]
    w2_ref,       # (d_z, H)    bf16
    b2_ref,       # (1, H)      f32
    wx_ref,       # (H, D_in)   bf16
    bx_ref,       # (1, D_in)   f32
    ct_ref,       # (d_z, K)    f32   RBF centers, transposed
    gamma_ref,    # (1, K)      f32   RBF bandwidths
    wr_ref,       # (K, D_in)   bf16
    br_ref,       # (1, D_in)   f32
    # outputs
    mux_ref,      # (TB, D_in)  MU_X_eval
    lvx_ref,      # (TB, D_in)  LOG_VAR_X_RBF
    small_ref,    # (TB, SMALL) lane-dense pack: [ z | mu_z | lv_z | 0-pad ]
):
    f32 = jnp.float32
    bf16 = jnp.bfloat16
    d_z = eps_ref.shape[-1]

    x = x_ref[...]

    # ----- VAE encoder (bf16 matmuls, f32 accumulate on the MXU) -----
    h = jnp.tanh(
        jnp.dot(x.astype(bf16), w1_ref[...], preferred_element_type=f32)
        + b1_ref[...])
    mu_lv = (jnp.dot(h.astype(bf16), wmuv_ref[...], preferred_element_type=f32)
             + bmuv_ref[...])                       # (TB, 2*d_z) = [mu_z | lv_z]
    mu_z = mu_lv[:, :d_z]
    lv_z = mu_lv[:, d_z:]

    # ----- reparameterization -----
    z = mu_z + jnp.exp(0.5 * lv_z) * eps_ref[...]

    # ----- VAE decoder (mean head) -----
    h2 = jnp.tanh(
        jnp.dot(z.astype(bf16), w2_ref[...], preferred_element_type=f32)
        + b2_ref[...])
    mu_x = (jnp.dot(h2.astype(bf16), wx_ref[...], preferred_element_type=f32)
            + bx_ref[...])

    # ----- RBF network on Z (squared distance on the VPU, unrolled over d_z) --
    ct = ct_ref[...]                                # (d_z, K) f32
    K = ct.shape[1]
    d2 = jnp.zeros((z.shape[0], K), f32)
    for j in range(d_z):                            # d_z is small & static
        diff = z[:, j:j + 1] - ct[j:j + 1, :]       # (TB, K)
        d2 = d2 + diff * diff
    phi = jnp.exp(-gamma_ref[...] * d2)             # (TB, K)
    lv_x_rbf = (jnp.dot(phi.astype(bf16), wr_ref[...],
                        preferred_element_type=f32) + br_ref[...])

    # ----- write outputs -----
    mux_ref[...] = mu_x
    lvx_ref[...] = lv_x_rbf

    # lane-dense packed store: [ z | mu_z | lv_z | pad ] -> one unmasked vst
    pad_w = small_ref.shape[-1] - 3 * d_z
    pieces = [z, mu_lv]                             # mu_lv already = [mu_z|lv_z]
    if pad_w:
        pieces.append(jnp.zeros((z.shape[0], pad_w), f32))
    small_ref[...] = jnp.concatenate(pieces, axis=-1)


def vae_rbf_forward(x_nchw, params, eps):
    """x_nchw: (B, C, H, W) float32.  Returns the 5-tuple of the PyTorch forward:
    (MU_X_eval, LOG_VAR_X_RBF, Z_ENC_eval, MU_Z_eval, LOG_VAR_Z_eval)."""
    f32 = jnp.float32
    bf16 = jnp.bfloat16

    B = x_nchw.shape[0]
    x2d = x_nchw.reshape(B, -1)                     # glue: flatten NCHW -> (B, D_in)
    D_in = x2d.shape[1]

    H = params["w1"].shape[1]
    d_z = params["wmu"].shape[1]
    K = params["ct"].shape[1]

    # --- fuse encoder heads, convert hot weights to bf16 ---
    wmuv = jnp.concatenate([params["wmu"], params["wlv"]], axis=1).astype(bf16)
    bmuv = jnp.concatenate([params["bmu"], params["blv"]], axis=1).astype(f32)

    # --- batch tiling: pad to sublane granularity, tile over a grid ---
    TB = min(128, _round_up(max(B, 8), 8))
    B_pad = _round_up(B, TB)
    if B_pad != B:
        x2d = jnp.pad(x2d, ((0, B_pad - B), (0, 0)))
        eps_p = jnp.pad(eps, ((0, B_pad - B), (0, 0)))
    else:
        eps_p = eps
    n_blocks = B_pad // TB

    # lane-dense packed small-output slab width
    SMALL = max(128, _round_up(3 * d_z, 128))

    def const_spec(shape):
        # same block for every grid step -> weights stay VMEM-resident
        return pl.BlockSpec(shape, lambda i: (0, 0))

    in_arrays = (
        x2d, eps_p,
        params["w1"].astype(bf16), params["b1"].astype(f32),
        wmuv, bmuv,
        params["w2"].astype(bf16), params["b2"].astype(f32),
        params["wx"].astype(bf16), params["bx"].astype(f32),
        params["ct"].astype(f32), params["gamma"].astype(f32),
        params["wr"].astype(bf16), params["br"].astype(f32),
    )

    in_specs = [
        pl.BlockSpec((TB, D_in), lambda i: (i, 0)),           # x (streamed)
        pl.BlockSpec((TB, d_z), lambda i: (i, 0)),            # eps (streamed)
        const_spec((D_in, H)), const_spec((1, H)),            # w1, b1
        const_spec((H, 2 * d_z)), const_spec((1, 2 * d_z)),   # wmuv, bmuv
        const_spec((d_z, H)), const_spec((1, H)),             # w2, b2
        const_spec((H, D_in)), const_spec((1, D_in)),         # wx, bx
        const_spec((d_z, K)), const_spec((1, K)),             # ct, gamma
        const_spec((K, D_in)), const_spec((1, D_in)),         # wr, br
    ]

    out_shape = (
        jax.ShapeDtypeStruct((B_pad, D_in), f32),   # MU_X_eval
        jax.ShapeDtypeStruct((B_pad, D_in), f32),   # LOG_VAR_X_RBF
        jax.ShapeDtypeStruct((B_pad, SMALL), f32),  # packed [z | mu_z | lv_z]
    )
    out_specs = (
        pl.BlockSpec((TB, D_in), lambda i: (i, 0)),
        pl.BlockSpec((TB, D_in), lambda i: (i, 0)),
        pl.BlockSpec((TB, SMALL), lambda i: (i, 0)),
    )

    mu_x, lv_x, packed = pl.pallas_call(
        vae_rbf_kernel,
        out_shape=out_shape,
        grid=(n_blocks,),
        in_specs=in_specs,
        out_specs=out_specs,
        compiler_params=pltpu.CompilerParams(
            dimension_semantics=("parallel",)),     # megacore split on v7x
    )(*in_arrays)

    z = packed[:B, 0:d_z]
    mu_z = packed[:B, d_z:2 * d_z]
    lv_z = packed[:B, 2 * d_z:3 * d_z]
    return mu_x[:B], lv_x[:B], z, mu_z, lv_z


def init_params(key, D_in, H, d_z, K):
    ks = jax.random.split(key, 9)
    scale = 0.05
    return {
        "w1": scale * jax.random.normal(ks[0], (D_in, H), jnp.float32),
        "b1": jnp.zeros((1, H), jnp.float32),
        "wmu": scale * jax.random.normal(ks[1], (H, d_z), jnp.float32),
        "bmu": jnp.zeros((1, d_z), jnp.float32),
        "wlv": scale * jax.random.normal(ks[2], (H, d_z), jnp.float32),
        "blv": jnp.zeros((1, d_z), jnp.float32),
        "w2": scale * jax.random.normal(ks[3], (d_z, H), jnp.float32),
        "b2": jnp.zeros((1, H), jnp.float32),
        "wx": scale * jax.random.normal(ks[4], (H, D_in), jnp.float32),
        "bx": jnp.zeros((1, D_in), jnp.float32),
        # RBF: K centers in latent space, per-center bandwidth, linear readout
        "ct": jax.random.normal(ks[5], (d_z, K), jnp.float32),
        "gamma": jnp.abs(jax.random.normal(ks[6], (1, K), jnp.float32)) + 0.5,
        "wr": scale * jax.random.normal(ks[7], (K, D_in), jnp.float32),
        "br": jnp.zeros((1, D_in), jnp.float32),
    }


def reference_forward(x_nchw, params, eps):
    """Pure-JAX reference.  Uses the bf16-quantized weights (cast back to f32)
    so it checks the same math the kernel implements."""
    f32, bf16 = jnp.float32, jnp.bfloat16
    deq = lambda w: w.astype(bf16).astype(f32)
    B = x_nchw.shape[0]
    x = x_nchw.reshape(B, -1)
    h = jnp.tanh(x @ deq(params["w1"]) + params["b1"])
    mu_z = h @ deq(params["wmu"]) + params["bmu"]
    lv_z = h @ deq(params["wlv"]) + params["blv"]
    z = mu_z + jnp.exp(0.5 * lv_z) * eps
    h2 = jnp.tanh(z @ deq(params["w2"]) + params["b2"])
    mu_x = h2 @ deq(params["wx"]) + params["bx"]
    ct = params["ct"]
    diff = z[:, :, None] - ct[None, :, :]
    d2 = jnp.sum(diff * diff, axis=1)
    phi = jnp.exp(-params["gamma"] * d2)
    lv_x = phi @ deq(params["wr"]) + params["br"]
    return mu_x, lv_x, z, mu_z, lv_z


if __name__ == "__main__":
    key = jax.random.PRNGKey(0)
    k_x, k_eps, k_p = jax.random.split(key, 3)

    B, C, Himg, Wimg = 2, 4, 16, 16        # NCHW input, as in PyTorch
    D_in = C * Himg * Wimg                 # 1024
    H = 64                                 # encoder/decoder hidden width
    d_z = 8                                # latent dim
    K = 16                                 # number of RBF centers

    x = jax.random.normal(k_x, (B, C, Himg, Wimg), jnp.float32)
    eps = jax.random.normal(k_eps, (B, d_z), jnp.float32)
    params = init_params(k_p, D_in, H, d_z, K)

    outs = jax.block_until_ready(vae_rbf_forward(x, params, eps))
    refs = reference_forward(x, params, eps)
    for o, r in zip(outs, refs):
        assert o.shape == r.shape and o.dtype == r.dtype
        # bf16 weights/activations on the matmul path -> loosened tolerance
        assert jnp.allclose(o, r, atol=2e-2, rtol=2e-2), "mismatch vs reference"

    print("KERNEL_OK")
</pallas_src>

<mosaic_0001>
module attributes {stable_mosaic.version = 11 : i64} {
  func.func @vae_rbf_kernel(%arg0: i32, %arg1: memref<8x1024xf32, #tpu.memory_space<vmem>>, %arg2: memref<8x8xf32, #tpu.memory_space<vmem>>, %arg3: memref<1024x64xbf16, #tpu.memory_space<vmem>>, %arg4: memref<1x64xf32, #tpu.memory_space<vmem>>, %arg5: memref<64x16xbf16, #tpu.memory_space<vmem>>, %arg6: memref<1x16xf32, #tpu.memory_space<vmem>>, %arg7: memref<8x64xbf16, #tpu.memory_space<vmem>>, %arg8: memref<1x64xf32, #tpu.memory_space<vmem>>, %arg9: memref<64x1024xbf16, #tpu.memory_space<vmem>>, %arg10: memref<1x1024xf32, #tpu.memory_space<vmem>>, %arg11: memref<8x16xf32, #tpu.memory_space<vmem>>, %arg12: memref<1x16xf32, #tpu.memory_space<vmem>>, %arg13: memref<16x1024xbf16, #tpu.memory_space<vmem>>, %arg14: memref<1x1024xf32, #tpu.memory_space<vmem>>, %arg15: memref<8x1024xf32, #tpu.memory_space<vmem>>, %arg16: memref<8x1024xf32, #tpu.memory_space<vmem>>, %arg17: memref<8x128xf32, #tpu.memory_space<vmem>>) attributes {dimension_semantics = [#tpu.dimension_semantics<parallel>], iteration_bounds = array<i64: 1>, scalar_prefetch = 0 : i64, scratch_operands = 0 : i64, tpu.core_type = #tpu.core_type<tc>, window_params = [{transform_indices = @transform_0, window_bounds = array<i64: 8, 1024>}, {transform_indices = @transform_1, window_bounds = array<i64: 8, 8>}, {pipeline_mode = #tpu.pipeline_mode<synchronous>, transform_indices = @transform_2, window_bounds = array<i64: 1024, 64>}, {pipeline_mode = #tpu.pipeline_mode<synchronous>, transform_indices = @transform_3, window_bounds = array<i64: 1, 64>}, {pipeline_mode = #tpu.pipeline_mode<synchronous>, transform_indices = @transform_4, window_bounds = array<i64: 64, 16>}, {pipeline_mode = #tpu.pipeline_mode<synchronous>, transform_indices = @transform_5, window_bounds = array<i64: 1, 16>}, {pipeline_mode = #tpu.pipeline_mode<synchronous>, transform_indices = @transform_6, window_bounds = array<i64: 8, 64>}, {pipeline_mode = #tpu.pipeline_mode<synchronous>, transform_indices = @transform_7, window_bounds = array<i64: 1, 64>}, {pipeline_mode = #tpu.pipeline_mode<synchronous>, transform_indices = @transform_8, window_bounds = array<i64: 64, 1024>}, {pipeline_mode = #tpu.pipeline_mode<synchronous>, transform_indices = @transform_9, window_bounds = array<i64: 1, 1024>}, {pipeline_mode = #tpu.pipeline_mode<synchronous>, transform_indices = @transform_10, window_bounds = array<i64: 8, 16>}, {pipeline_mode = #tpu.pipeline_mode<synchronous>, transform_indices = @transform_11, window_bounds = array<i64: 1, 16>}, {pipeline_mode = #tpu.pipeline_mode<synchronous>, transform_indices = @transform_12, window_bounds = array<i64: 16, 1024>}, {pipeline_mode = #tpu.pipeline_mode<synchronous>, transform_indices = @transform_13, window_bounds = array<i64: 1, 1024>}, {transform_indices = @transform_14, window_bounds = array<i64: 8, 1024>}, {transform_indices = @transform_15, window_bounds = array<i64: 8, 1024>}, {transform_indices = @transform_16, window_bounds = array<i64: 8, 128>}]} {
    %c0 = arith.constant 0 : index
    %c0_0 = arith.constant 0 : index
    %0 = vector.load %arg1[%c0, %c0_0] : memref<8x1024xf32, #tpu.memory_space<vmem>>, vector<8x1024xf32>
    %1 = arith.truncf %0 : vector<8x1024xf32> to vector<8x1024xbf16>
    %c0_1 = arith.constant 0 : index
    %c0_2 = arith.constant 0 : index
    %2 = vector.load %arg3[%c0_1, %c0_2] : memref<1024x64xbf16, #tpu.memory_space<vmem>>, vector<1024x64xbf16>
    %cst = arith.constant dense<0.000000e+00> : vector<8x64xf32>
    %3 = tpu.matmul %1, %2, %cst {dimension_numbers = #tpu.dot_dimension_numbers<[1], [0], [0], [1], [0, 0, 1, 1], [], []>} : vector<8x1024xbf16>, vector<1024x64xbf16>, vector<8x64xf32> -> vector<8x64xf32>
    %c0_3 = arith.constant 0 : index
    %c0_4 = arith.constant 0 : index
    %4 = vector.load %arg4[%c0_3, %c0_4] : memref<1x64xf32, #tpu.memory_space<vmem>>, vector<1x64xf32>
    %5 = vector.broadcast %4 : vector<1x64xf32> to vector<8x64xf32>
    %6 = arith.addf %3, %5 : vector<8x64xf32>
    %7 = math.tanh %6 : vector<8x64xf32>
    %8 = arith.truncf %7 : vector<8x64xf32> to vector<8x64xbf16>
    %c0_5 = arith.constant 0 : index
    %c0_6 = arith.constant 0 : index
    %9 = vector.load %arg5[%c0_5, %c0_6] : memref<64x16xbf16, #tpu.memory_space<vmem>>, vector<64x16xbf16>
    %cst_7 = arith.constant dense<0.000000e+00> : vector<8x16xf32>
    %10 = tpu.matmul %8, %9, %cst_7 {dimension_numbers = #tpu.dot_dimension_numbers<[1], [0], [0], [1], [0, 0, 1, 1], [], []>} : vector<8x64xbf16>, vector<64x16xbf16>, vector<8x16xf32> -> vector<8x16xf32>
    %c0_8 = arith.constant 0 : index
    %c0_9 = arith.constant 0 : index
    %11 = vector.load %arg6[%c0_8, %c0_9] : memref<1x16xf32, #tpu.memory_space<vmem>>, vector<1x16xf32>
    %12 = vector.broadcast %11 : vector<1x16xf32> to vector<8x16xf32>
    %13 = arith.addf %10, %12 : vector<8x16xf32>
    %14 = vector.extract_strided_slice %13 {offsets = [0, 0], sizes = [8, 8], strides = [1, 1]} : vector<8x16xf32> to vector<8x8xf32>
    %15 = vector.extract_strided_slice %13 {offsets = [0, 8], sizes = [8, 8], strides = [1, 1]} : vector<8x16xf32> to vector<8x8xf32>
    %cst_10 = arith.constant 5.000000e-01 : f32
    %16 = vector.broadcast %cst_10 : f32 to vector<8x8xf32>
    %17 = arith.mulf %16, %15 : vector<8x8xf32>
    %18 = math.exp %17 : vector<8x8xf32>
    %c0_11 = arith.constant 0 : index
    %c0_12 = arith.constant 0 : index
    %19 = vector.load %arg2[%c0_11, %c0_12] : memref<8x8xf32, #tpu.memory_space<vmem>>, vector<8x8xf32>
    %20 = arith.mulf %18, %19 : vector<8x8xf32>
    %21 = arith.addf %14, %20 : vector<8x8xf32>
    %22 = arith.truncf %21 : vector<8x8xf32> to vector<8x8xbf16>
    %c0_13 = arith.constant 0 : index
    %c0_14 = arith.constant 0 : index
    %23 = vector.load %arg7[%c0_13, %c0_14] : memref<8x64xbf16, #tpu.memory_space<vmem>>, vector<8x64xbf16>
    %cst_15 = arith.constant dense<0.000000e+00> : vector<8x64xf32>
    %24 = tpu.matmul %22, %23, %cst_15 {dimension_numbers = #tpu.dot_dimension_numbers<[1], [0], [0], [1], [0, 0, 1, 1], [], []>} : vector<8x8xbf16>, vector<8x64xbf16>, vector<8x64xf32> -> vector<8x64xf32>
    %c0_16 = arith.constant 0 : index
    %c0_17 = arith.constant 0 : index
    %25 = vector.load %arg8[%c0_16, %c0_17] : memref<1x64xf32, #tpu.memory_space<vmem>>, vector<1x64xf32>
    %26 = vector.broadcast %25 : vector<1x64xf32> to vector<8x64xf32>
    %27 = arith.addf %24, %26 : vector<8x64xf32>
    %28 = math.tanh %27 : vector<8x64xf32>
    %29 = arith.truncf %28 : vector<8x64xf32> to vector<8x64xbf16>
    %c0_18 = arith.constant 0 : index
    %c0_19 = arith.constant 0 : index
    %30 = vector.load %arg9[%c0_18, %c0_19] : memref<64x1024xbf16, #tpu.memory_space<vmem>>, vector<64x1024xbf16>
    %cst_20 = arith.constant dense<0.000000e+00> : vector<8x1024xf32>
    %31 = tpu.matmul %29, %30, %cst_20 {dimension_numbers = #tpu.dot_dimension_numbers<[1], [0], [0], [1], [0, 0, 1, 1], [], []>} : vector<8x64xbf16>, vector<64x1024xbf16>, vector<8x1024xf32> -> vector<8x1024xf32>
    %c0_21 = arith.constant 0 : index
    %c0_22 = arith.constant 0 : index
    %32 = vector.load %arg10[%c0_21, %c0_22] : memref<1x1024xf32, #tpu.memory_space<vmem>>, vector<1x1024xf32>
    %33 = vector.broadcast %32 : vector<1x1024xf32> to vector<8x1024xf32>
    %34 = arith.addf %31, %33 : vector<8x1024xf32>
    %c0_23 = arith.constant 0 : index
    %c0_24 = arith.constant 0 : index
    %35 = vector.load %arg11[%c0_23, %c0_24] : memref<8x16xf32, #tpu.memory_space<vmem>>, vector<8x16xf32>
    %cst_25 = arith.constant 0.000000e+00 : f32
    %36 = vector.broadcast %cst_25 : f32 to vector<8x16xf32>
    %37 = vector.extract_strided_slice %21 {offsets = [0, 0], sizes = [8, 1], strides = [1, 1]} : vector<8x8xf32> to vector<8x1xf32>
    %38 = vector.extract_strided_slice %35 {offsets = [0, 0], sizes = [1, 16], strides = [1, 1]} : vector<8x16xf32> to vector<1x16xf32>
    %39 = vector.broadcast %37 : vector<8x1xf32> to vector<8x16xf32>
    %40 = vector.broadcast %38 : vector<1x16xf32> to vector<8x16xf32>
    %41 = arith.subf %39, %40 : vector<8x16xf32>
    %42 = arith.mulf %41, %41 : vector<8x16xf32>
    %43 = arith.addf %36, %42 : vector<8x16xf32>
    %44 = vector.extract_strided_slice %21 {offsets = [0, 1], sizes = [8, 1], strides = [1, 1]} : vector<8x8xf32> to vector<8x1xf32>
    %45 = vector.extract_strided_slice %35 {offsets = [1, 0], sizes = [1, 16], strides = [1, 1]} : vector<8x16xf32> to vector<1x16xf32>
    %46 = vector.broadcast %44 : vector<8x1xf32> to vector<8x16xf32>
    %47 = vector.broadcast %45 : vector<1x16xf32> to vector<8x16xf32>
    %48 = arith.subf %46, %47 : vector<8x16xf32>
    %49 = arith.mulf %48, %48 : vector<8x16xf32>
    %50 = arith.addf %43, %49 : vector<8x16xf32>
    %51 = vector.extract_strided_slice %21 {offsets = [0, 2], sizes = [8, 1], strides = [1, 1]} : vector<8x8xf32> to vector<8x1xf32>
    %52 = vector.extract_strided_slice %35 {offsets = [2, 0], sizes = [1, 16], strides = [1, 1]} : vector<8x16xf32> to vector<1x16xf32>
    %53 = vector.broadcast %51 : vector<8x1xf32> to vector<8x16xf32>
    %54 = vector.broadcast %52 : vector<1x16xf32> to vector<8x16xf32>
    %55 = arith.subf %53, %54 : vector<8x16xf32>
    %56 = arith.mulf %55, %55 : vector<8x16xf32>
    %57 = arith.addf %50, %56 : vector<8x16xf32>
    %58 = vector.extract_strided_slice %21 {offsets = [0, 3], sizes = [8, 1], strides = [1, 1]} : vector<8x8xf32> to vector<8x1xf32>
    %59 = vector.extract_strided_slice %35 {offsets = [3, 0], sizes = [1, 16], strides = [1, 1]} : vector<8x16xf32> to vector<1x16xf32>
    %60 = vector.broadcast %58 : vector<8x1xf32> to vector<8x16xf32>
    %61 = vector.broadcast %59 : vector<1x16xf32> to vector<8x16xf32>
    %62 = arith.subf %60, %61 : vector<8x16xf32>
    %63 = arith.mulf %62, %62 : vector<8x16xf32>
    %64 = arith.addf %57, %63 : vector<8x16xf32>
    %65 = vector.extract_strided_slice %21 {offsets = [0, 4], sizes = [8, 1], strides = [1, 1]} : vector<8x8xf32> to vector<8x1xf32>
    %66 = vector.extract_strided_slice %35 {offsets = [4, 0], sizes = [1, 16], strides = [1, 1]} : vector<8x16xf32> to vector<1x16xf32>
    %67 = vector.broadcast %65 : vector<8x1xf32> to vector<8x16xf32>
    %68 = vector.broadcast %66 : vector<1x16xf32> to vector<8x16xf32>
    %69 = arith.subf %67, %68 : vector<8x16xf32>
    %70 = arith.mulf %69, %69 : vector<8x16xf32>
    %71 = arith.addf %64, %70 : vector<8x16xf32>
    %72 = vector.extract_strided_slice %21 {offsets = [0, 5], sizes = [8, 1], strides = [1, 1]} : vector<8x8xf32> to vector<8x1xf32>
    %73 = vector.extract_strided_slice %35 {offsets = [5, 0], sizes = [1, 16], strides = [1, 1]} : vector<8x16xf32> to vector<1x16xf32>
    %74 = vector.broadcast %72 : vector<8x1xf32> to vector<8x16xf32>
    %75 = vector.broadcast %73 : vector<1x16xf32> to vector<8x16xf32>
    %76 = arith.subf %74, %75 : vector<8x16xf32>
    %77 = arith.mulf %76, %76 : vector<8x16xf32>
    %78 = arith.addf %71, %77 : vector<8x16xf32>
    %79 = vector.extract_strided_slice %21 {offsets = [0, 6], sizes = [8, 1], strides = [1, 1]} : vector<8x8xf32> to vector<8x1xf32>
    %80 = vector.extract_strided_slice %35 {offsets = [6, 0], sizes = [1, 16], strides = [1, 1]} : vector<8x16xf32> to vector<1x16xf32>
    %81 = vector.broadcast %79 : vector<8x1xf32> to vector<8x16xf32>
    %82 = vector.broadcast %80 : vector<1x16xf32> to vector<8x16xf32>
    %83 = arith.subf %81, %82 : vector<8x16xf32>
    %84 = arith.mulf %83, %83 : vector<8x16xf32>
    %85 = arith.addf %78, %84 : vector<8x16xf32>
    %86 = vector.extract_strided_slice %21 {offsets = [0, 7], sizes = [8, 1], strides = [1, 1]} : vector<8x8xf32> to vector<8x1xf32>
    %87 = vector.extract_strided_slice %35 {offsets = [7, 0], sizes = [1, 16], strides = [1, 1]} : vector<8x16xf32> to vector<1x16xf32>
    %88 = vector.broadcast %86 : vector<8x1xf32> to vector<8x16xf32>
    %89 = vector.broadcast %87 : vector<1x16xf32> to vector<8x16xf32>
    %90 = arith.subf %88, %89 : vector<8x16xf32>
    %91 = arith.mulf %90, %90 : vector<8x16xf32>
    %92 = arith.addf %85, %91 : vector<8x16xf32>
    %c0_26 = arith.constant 0 : index
    %c0_27 = arith.constant 0 : index
    %93 = vector.load %arg12[%c0_26, %c0_27] : memref<1x16xf32, #tpu.memory_space<vmem>>, vector<1x16xf32>
    %cst_28 = arith.constant 0.000000e+00 : f32
    %94 = vector.broadcast %cst_28 : f32 to vector<1x16xf32>
    %95 = arith.subf %94, %93 : vector<1x16xf32>
    %96 = vector.broadcast %95 : vector<1x16xf32> to vector<8x16xf32>
    %97 = arith.mulf %96, %92 : vector<8x16xf32>
    %98 = math.exp %97 : vector<8x16xf32>
    %99 = arith.truncf %98 : vector<8x16xf32> to vector<8x16xbf16>
    %c0_29 = arith.constant 0 : index
    %c0_30 = arith.constant 0 : index
    %100 = vector.load %arg13[%c0_29, %c0_30] : memref<16x1024xbf16, #tpu.memory_space<vmem>>, vector<16x1024xbf16>
    %cst_31 = arith.constant dense<0.000000e+00> : vector<8x1024xf32>
    %101 = tpu.matmul %99, %100, %cst_31 {dimension_numbers = #tpu.dot_dimension_numbers<[1], [0], [0], [1], [0, 0, 1, 1], [], []>} : vector<8x16xbf16>, vector<16x1024xbf16>, vector<8x1024xf32> -> vector<8x1024xf32>
    %c0_32 = arith.constant 0 : index
    %c0_33 = arith.constant 0 : index
    %102 = vector.load %arg14[%c0_32, %c0_33] : memref<1x1024xf32, #tpu.memory_space<vmem>>, vector<1x1024xf32>
    %103 = vector.broadcast %102 : vector<1x1024xf32> to vector<8x1024xf32>
    %104 = arith.addf %101, %103 : vector<8x1024xf32>
    %c0_34 = arith.constant 0 : index
    %c0_35 = arith.constant 0 : index
    %105 = vector.load %arg15[%c0_34, %c0_35] : memref<8x1024xf32, #tpu.memory_space<vmem>>, vector<8x1024xf32>
    tpu.vector_store %arg15[%c0_34, %c0_35], %34 {strides = array<i32>} : memref<8x1024xf32, #tpu.memory_space<vmem>>, vector<8x1024xf32>,
    %c0_36 = arith.constant 0 : index
    %c0_37 = arith.constant 0 : index
    %106 = vector.load %arg16[%c0_36, %c0_37] : memref<8x1024xf32, #tpu.memory_space<vmem>>, vector<8x1024xf32>
    tpu.vector_store %arg16[%c0_36, %c0_37], %104 {strides = array<i32>} : memref<8x1024xf32, #tpu.memory_space<vmem>>, vector<8x1024xf32>,
    %cst_38 = arith.constant 0.000000e+00 : f32
    %107 = vector.broadcast %cst_38 : f32 to vector<8x104xf32>
    %108 = tpu.concatenate %21, %13, %107 in 1 : vector<8x8xf32>, vector<8x16xf32>, vector<8x104xf32> -> vector<8x128xf32>
    %c0_39 = arith.constant 0 : index
    %c0_40 = arith.constant 0 : index
    %109 = vector.load %arg17[%c0_39, %c0_40] : memref<8x128xf32, #tpu.memory_space<vmem>>, vector<8x128xf32>
    tpu.vector_store %arg17[%c0_39, %c0_40], %108 {strides = array<i32>} : memref<8x128xf32, #tpu.memory_space<vmem>>, vector<8x128xf32>,
    return
  }
  func.func @transform_0(%arg0: i32) -> (i32, i32) {
    %c0_i32 = arith.constant 0 : i32
    %c0_i32_0 = arith.constant 0 : i32
    return %arg0, %c0_i32 : i32, i32
  }
  func.func @transform_1(%arg0: i32) -> (i32, i32) {
    %c0_i32 = arith.constant 0 : i32
    %c0_i32_0 = arith.constant 0 : i32
    return %arg0, %c0_i32 : i32, i32
  }
  func.func @transform_2(%arg0: i32) -> (i32, i32) {
    %c0_i32 = arith.constant 0 : i32
    %c0_i32_0 = arith.constant 0 : i32
    %c0_i32_1 = arith.constant 0 : i32
    return %c0_i32, %c0_i32_0 : i32, i32
  }
  func.func @transform_3(%arg0: i32) -> (i32, i32) {
    %c0_i32 = arith.constant 0 : i32
    %c0_i32_0 = arith.constant 0 : i32
    %c0_i32_1 = arith.constant 0 : i32
    return %c0_i32, %c0_i32_0 : i32, i32
  }
  func.func @transform_4(%arg0: i32) -> (i32, i32) {
    %c0_i32 = arith.constant 0 : i32
    %c0_i32_0 = arith.constant 0 : i32
    %c0_i32_1 = arith.constant 0 : i32
    return %c0_i32, %c0_i32_0 : i32, i32
  }
  func.func @transform_5(%arg0: i32) -> (i32, i32) {
    %c0_i32 = arith.constant 0 : i32
    %c0_i32_0 = arith.constant 0 : i32
    %c0_i32_1 = arith.constant 0 : i32
    return %c0_i32, %c0_i32_0 : i32, i32
  }
  func.func @transform_6(%arg0: i32) -> (i32, i32) {
    %c0_i32 = arith.constant 0 : i32
    %c0_i32_0 = arith.constant 0 : i32
    %c0_i32_1 = arith.constant 0 : i32
    return %c0_i32, %c0_i32_0 : i32, i32
  }
  func.func @transform_7(%arg0: i32) -> (i32, i32) {
    %c0_i32 = arith.constant 0 : i32
    %c0_i32_0 = arith.constant 0 : i32
    %c0_i32_1 = arith.constant 0 : i32
    return %c0_i32, %c0_i32_0 : i32, i32
  }
  func.func @transform_8(%arg0: i32) -> (i32, i32) {
    %c0_i32 = arith.constant 0 : i32
    %c0_i32_0 = arith.constant 0 : i32
    %c0_i32_1 = arith.constant 0 : i32
    return %c0_i32, %c0_i32_0 : i32, i32
  }
  func.func @transform_9(%arg0: i32) -> (i32, i32) {
    %c0_i32 = arith.constant 0 : i32
    %c0_i32_0 = arith.constant 0 : i32
    %c0_i32_1 = arith.constant 0 : i32
    return %c0_i32, %c0_i32_0 : i32, i32
  }
  func.func @transform_10(%arg0: i32) -> (i32, i32) {
    %c0_i32 = arith.constant 0 : i32
    %c0_i32_0 = arith.constant 0 : i32
    %c0_i32_1 = arith.constant 0 : i32
    return %c0_i32, %c0_i32_0 : i32, i32
  }
  func.func @transform_11(%arg0: i32) -> (i32, i32) {
    %c0_i32 = arith.constant 0 : i32
    %c0_i32_0 = arith.constant 0 : i32
    %c0_i32_1 = arith.constant 0 : i32
    return %c0_i32, %c0_i32_0 : i32, i32
  }
  func.func @transform_12(%arg0: i32) -> (i32, i32) {
    %c0_i32 = arith.constant 0 : i32
    %c0_i32_0 = arith.constant 0 : i32
    %c0_i32_1 = arith.constant 0 : i32
    return %c0_i32, %c0_i32_0 : i32, i32
  }
  func.func @transform_13(%arg0: i32) -> (i32, i32) {
    %c0_i32 = arith.constant 0 : i32
    %c0_i32_0 = arith.constant 0 : i32
    %c0_i32_1 = arith.constant 0 : i32
    return %c0_i32, %c0_i32_0 : i32, i32
  }
  func.func @transform_14(%arg0: i32) -> (i32, i32) {
    %c0_i32 = arith.constant 0 : i32
    %c0_i32_0 = arith.constant 0 : i32
    return %arg0, %c0_i32 : i32, i32
  }
  func.func @transform_15(%arg0: i32) -> (i32, i32) {
    %c0_i32 = arith.constant 0 : i32
    %c0_i32_0 = arith.constant 0 : i32
    return %arg0, %c0_i32 : i32, i32
  }
  func.func @transform_16(%arg0: i32) -> (i32, i32) {
    %c0_i32 = arith.constant 0 : i32
    %c0_i32_0 = arith.constant 0 : i32
    return %arg0, %c0_i32 : i32, i32
  }
}

</mosaic_0001>

<llo_original>
// kernel: tpu_custom_call.1
$region0: #{tpu_custom_call.1}
  #allocation0 [shape = 'u32[]', space=smem, size = 0x4, offset = 0x4, fixed_abs, tag = 'smem constant byte address 0x4 - core index']
  #allocation1 [shape = 'u32[144,128]{1,0:T(1,128)}', space=vmem, size = 0x12000, scoped, tag = 'internal scratch']
  %s0 = inlined_call_operand.vmem [shape: f32[8,1024], index: 0, kind: input, shape index: {}]
  %s1 = inlined_call_operand.vmem [shape: f32[8,8], index: 1, kind: input, shape index: {}]
  %s2 = inlined_call_operand.vmem [shape: bf16[1024,64], index: 2, kind: input, shape index: {}]
  %s3 = inlined_call_operand.vmem [shape: f32[1,64], index: 3, kind: input, shape index: {}]
  %s4 = inlined_call_operand.vmem [shape: bf16[64,16], index: 4, kind: input, shape index: {}]
  %s5 = inlined_call_operand.vmem [shape: f32[1,16], index: 5, kind: input, shape index: {}]
  %s6 = inlined_call_operand.vmem [shape: bf16[8,64], index: 6, kind: input, shape index: {}]
  %s7 = inlined_call_operand.vmem [shape: f32[1,64], index: 7, kind: input, shape index: {}]
  %s8 = inlined_call_operand.vmem [shape: bf16[64,1024], index: 8, kind: input, shape index: {}]
  %s9 = inlined_call_operand.vmem [shape: f32[1,1024], index: 9, kind: input, shape index: {}]
  %s10 = inlined_call_operand.vmem [shape: f32[8,16], index: 10, kind: input, shape index: {}]
  %s11 = inlined_call_operand.vmem [shape: f32[1,16], index: 11, kind: input, shape index: {}]
  %s12 = inlined_call_operand.vmem [shape: bf16[16,1024], index: 12, kind: input, shape index: {}]
  %s13 = inlined_call_operand.vmem [shape: f32[1,1024], index: 13, kind: input, shape index: {}]
  %s14 = inlined_call_operand.hbm [shape: f32[8,1024], index: 14, kind: output, shape index: {0}]
  %s15 = inlined_call_operand.hbm [shape: f32[8,1024], index: 15, kind: output, shape index: {1}]
  %s16 = inlined_call_operand.hbm [shape: f32[8,128], index: 16, kind: output, shape index: {2}]
  %17 = xla_tuple %s14, %s15, %s16
  %s18 = sld [smem:[#allocation0]]
  $region82: #{tpu_custom_call.1} parent=0
    _
  %s20 = ssub.s32 1, %s18
  %s21 = scalar_select 0, %s20, %s18
  $region1: #{tpu_custom_call.1} parent=0
    #allocation2 [shape = 'u8[32768]{0}', space=vmem, size = 0x8000, scoped, tag = 'output window, operand 0, single buffered']
    #allocation3 [shape = 's32[1]{0}', space=sflag, size = 0x4, scoped, tag = 'scoped memory for tpu_custom_call.1']
    #allocation4 [shape = 'u8[32768]{0}', space=vmem, size = 0x8000, scoped, tag = 'output window, operand 1, single buffered']
    #allocation5 [shape = 's32[1]{0}', space=sflag, size = 0x4, scoped, tag = 'scoped memory for tpu_custom_call.1']
    #allocation6 [shape = 'u8[4096]{0}', space=vmem, size = 0x1000, scoped, tag = 'output window, operand 2, single buffered']
    %22 = vsyncpa [#allocation3], 0
    %23 = vsyncpa [#allocation5], 0
    // Predicated region
    $region2: #{tpu_custom_call.1} parent=1 // pred_check
      _
    $region3: #{tpu_custom_call.1} parent=1 // pred_check_branch
      %25 = sbr.rel (0) target = $region5
    $region4: #{tpu_custom_call.1} parent=1 // pred_region
      _
    $region5: #{tpu_custom_call.1} parent=1 // pred_fallthru
      _
    // Predicated region
    $region6: #{tpu_custom_call.1} parent=1 // pred_check
      _
    $region7: #{tpu_custom_call.1} parent=1 // pred_check_branch
      %27 = sbr.rel (0) target = $region9
    $region8: #{tpu_custom_call.1} parent=1 // pred_region
      _
    $region9: #{tpu_custom_call.1} parent=1 // pred_fallthru
      _
    // Predicated region
    $region10: #{tpu_custom_call.1} parent=1 // pred_check
      _
    $region11: #{tpu_custom_call.1} parent=1 // pred_check_branch
      %29 = sbr.rel (0) target = $region13
    $region12: #{tpu_custom_call.1} parent=1 // pred_region
      _
    $region13: #{tpu_custom_call.1} parent=1 // pred_fallthru
      _
    // Predicated region
    $region14: #{tpu_custom_call.1} parent=1 // pred_check
      _
    $region15: #{tpu_custom_call.1} parent=1 // pred_check_branch
      %31 = sbr.rel (0) target = $region17
    $region16: #{tpu_custom_call.1} parent=1 // pred_region
      _
    $region17: #{tpu_custom_call.1} parent=1 // pred_fallthru
      _
    // Predicated region
    $region18: #{tpu_custom_call.1} parent=1 // pred_check
      _
    $region19: #{tpu_custom_call.1} parent=1 // pred_check_branch
      %33 = sbr.rel (0) target = $region21
    $region20: #{tpu_custom_call.1} parent=1 // pred_region
      _
    $region21: #{tpu_custom_call.1} parent=1 // pred_fallthru
      _
    // Predicated region
    $region22: #{tpu_custom_call.1} parent=1 // pred_check
      _
    $region23: #{tpu_custom_call.1} parent=1 // pred_check_branch
      %35 = sbr.rel (0) target = $region25
    $region24: #{tpu_custom_call.1} parent=1 // pred_region
      _
    $region25: #{tpu_custom_call.1} parent=1 // pred_fallthru
      _
    // Predicated region
    $region26: #{tpu_custom_call.1} parent=1 // pred_check
      _
    $region27: #{tpu_custom_call.1} parent=1 // pred_check_branch
      %37 = sbr.rel (0) target = $region29
    $region28: #{tpu_custom_call.1} parent=1 // pred_region
      _
    $region29: #{tpu_custom_call.1} parent=1 // pred_fallthru
      _
    // Predicated region
    $region30: #{tpu_custom_call.1} parent=1 // pred_check
      _
    $region31: #{tpu_custom_call.1} parent=1 // pred_check_branch
      %39 = sbr.rel (0) target = $region33
    $region32: #{tpu_custom_call.1} parent=1 // pred_region
      _
    $region33: #{tpu_custom_call.1} parent=1 // pred_fallthru
      _
    // Predicated region
    $region34: #{tpu_custom_call.1} parent=1 // pred_check
      _
    $region35: #{tpu_custom_call.1} parent=1 // pred_check_branch
      %41 = sbr.rel (0) target = $region37
    $region36: #{tpu_custom_call.1} parent=1 // pred_region
      _
    $region37: #{tpu_custom_call.1} parent=1 // pred_fallthru
      _
    // Predicated region
    $region38: #{tpu_custom_call.1} parent=1 // pred_check
      _
    $region39: #{tpu_custom_call.1} parent=1 // pred_check_branch
      %43 = sbr.rel (0) target = $region41
    $region40: #{tpu_custom_call.1} parent=1 // pred_region
      _
    $region41: #{tpu_custom_call.1} parent=1 // pred_fallthru
      _
    // Predicated region
    $region42: #{tpu_custom_call.1} parent=1 // pred_check
      _
    $region43: #{tpu_custom_call.1} parent=1 // pred_check_branch
      %45 = sbr.rel (0) target = $region45
    $region44: #{tpu_custom_call.1} parent=1 // pred_region
      _
    $region45: #{tpu_custom_call.1} parent=1 // pred_fallthru
      _
    // Predicated region
    $region46: #{tpu_custom_call.1} parent=1 // pred_check
      _
    $region47: #{tpu_custom_call.1} parent=1 // pred_check_branch
      %47 = sbr.rel (0) target = $region49
    $region48: #{tpu_custom_call.1} parent=1 // pred_region
      _
    $region49: #{tpu_custom_call.1} parent=1 // pred_fallthru
      _
    // Predicated region
    $region50: #{tpu_custom_call.1} parent=1 // pred_check
      _
    $region51: #{tpu_custom_call.1} parent=1 // pred_check_branch
      %49 = sbr.rel (0) target = $region53
    $region52: #{tpu_custom_call.1} parent=1 // pred_region
      _
    $region53: #{tpu_custom_call.1} parent=1 // pred_fallthru
      _
    // Predicated region
    $region54: #{tpu_custom_call.1} parent=1 // pred_check
      _
    $region55: #{tpu_custom_call.1} parent=1 // pred_check_branch
      %51 = sbr.rel (0) target = $region57
    $region56: #{tpu_custom_call.1} parent=1 // pred_region
      _
    $region57: #{tpu_custom_call.1} parent=1 // pred_fallthru
      _
    %v53 = vld [vmem:[%s0] sm:$0xff]
    %v54 = vld [vmem:[%s0 + $0x8] sm:$0xff]
    %v55 = vld [vmem:[%s0 + $0x10] sm:$0xff]
    %v56 = vld [vmem:[%s0 + $0x18] sm:$0xff]
    %v57 = vld [vmem:[%s0 + $0x20] sm:$0xff]
    %v58 = vld [vmem:[%s0 + $0x28] sm:$0xff]
    %v59 = vld [vmem:[%s0 + $0x30] sm:$0xff]
    %v60 = vld [vmem:[%s0 + $0x38] sm:$0xff]
    %v61 = vpack.c.bf16 %v53, %v53
    %v62 = vpack.c.bf16 %v54, %v54
    %v63 = vpack.c.bf16 %v55, %v55
    %v64 = vpack.c.bf16 %v56, %v56
    %v65 = vpack.c.bf16 %v57, %v57
    %v66 = vpack.c.bf16 %v58, %v58
    %v67 = vpack.c.bf16 %v59, %v59
    %v68 = vpack.c.bf16 %v60, %v60
    %v69 = vld [vmem:[%s2] sm:$0xf]
    %v70 = vld [vmem:[%s2 + $0x4] sm:$0xf]
    %v71 = vld [vmem:[%s2 + $0x8] sm:$0xf]
    %v72 = vld [vmem:[%s2 + $0xc] sm:$0xf]
    %v73 = vld [vmem:[%s2 + $0x10] sm:$0xf]
    %v74 = vld [vmem:[%s2 + $0x14] sm:$0xf]
    %v75 = vld [vmem:[%s2 + $0x18] sm:$0xf]
    %v76 = vld [vmem:[%s2 + $0x1c] sm:$0xf]
    %v77 = vld [vmem:[%s2 + $0x20] sm:$0xf]
    %v78 = vld [vmem:[%s2 + $0x24] sm:$0xf]
    %v79 = vld [vmem:[%s2 + $0x28] sm:$0xf]
    %v80 = vld [vmem:[%s2 + $0x2c] sm:$0xf]
    %v81 = vld [vmem:[%s2 + $0x30] sm:$0xf]
    %v82 = vld [vmem:[%s2 + $0x34] sm:$0xf]
    %v83 = vld [vmem:[%s2 + $0x38] sm:$0xf]
    %v84 = vld [vmem:[%s2 + $0x3c] sm:$0xf]
    %v85 = vld [vmem:[%s2 + $0x40] sm:$0xf]
    %v86 = vld [vmem:[%s2 + $0x44] sm:$0xf]
    %v87 = vld [vmem:[%s2 + $0x48] sm:$0xf]
    %v88 = vld [vmem:[%s2 + $0x4c] sm:$0xf]
    %v89 = vld [vmem:[%s2 + $0x50] sm:$0xf]
    %v90 = vld [vmem:[%s2 + $0x54] sm:$0xf]
    %v91 = vld [vmem:[%s2 + $0x58] sm:$0xf]
    %v92 = vld [vmem:[%s2 + $0x5c] sm:$0xf]
    %v93 = vld [vmem:[%s2 + $0x60] sm:$0xf]
    %v94 = vld [vmem:[%s2 + $0x64] sm:$0xf]
    %v95 = vld [vmem:[%s2 + $0x68] sm:$0xf]
    %v96 = vld [vmem:[%s2 + $0x6c] sm:$0xf]
    %v97 = vld [vmem:[%s2 + $0x70] sm:$0xf]
    %v98 = vld [vmem:[%s2 + $0x74] sm:$0xf]
    %v99 = vld [vmem:[%s2 + $0x78] sm:$0xf]
    %v100 = vld [vmem:[%s2 + $0x7c] sm:$0xf]
    %v101 = vld [vmem:[%s2 + $0x80] sm:$0xf]
    %v102 = vld [vmem:[%s2 + $0x84] sm:$0xf]
    %v103 = vld [vmem:[%s2 + $0x88] sm:$0xf]
    %v104 = vld [vmem:[%s2 + $0x8c] sm:$0xf]
    %v105 = vld [vmem:[%s2 + $0x90] sm:$0xf]
    %v106 = vld [vmem:[%s2 + $0x94] sm:$0xf]
    %v107 = vld [vmem:[%s2 + $0x98] sm:$0xf]
    %v108 = vld [vmem:[%s2 + $0x9c] sm:$0xf]
    %v109 = vld [vmem:[%s2 + $0xa0] sm:$0xf]
    %v110 = vld [vmem:[%s2 + $0xa4] sm:$0xf]
    %v111 = vld [vmem:[%s2 + $0xa8] sm:$0xf]
    %v112 = vld [vmem:[%s2 + $0xac] sm:$0xf]
    %v113 = vld [vmem:[%s2 + $0xb0] sm:$0xf]
    %v114 = vld [vmem:[%s2 + $0xb4] sm:$0xf]
    %v115 = vld [vmem:[%s2 + $0xb8] sm:$0xf]
    %v116 = vld [vmem:[%s2 + $0xbc] sm:$0xf]
    %v117 = vld [vmem:[%s2 + $0xc0] sm:$0xf]
    %v118 = vld [vmem:[%s2 + $0xc4] sm:$0xf]
    %v119 = vld [vmem:[%s2 + $0xc8] sm:$0xf]
    %v120 = vld [vmem:[%s2 + $0xcc] sm:$0xf]
    %v121 = vld [vmem:[%s2 + $0xd0] sm:$0xf]
    %v122 = vld [vmem:[%s2 + $0xd4] sm:$0xf]
    %v123 = vld [vmem:[%s2 + $0xd8] sm:$0xf]
    %v124 = vld [vmem:[%s2 + $0xdc] sm:$0xf]
    %v125 = vld [vmem:[%s2 + $0xe0] sm:$0xf]
    %v126 = vld [vmem:[%s2 + $0xe4] sm:$0xf]
    %v127 = vld [vmem:[%s2 + $0xe8] sm:$0xf]
    %v128 = vld [vmem:[%s2 + $0xec] sm:$0xf]
    %v129 = vld [vmem:[%s2 + $0xf0] sm:$0xf]
    %v130 = vld [vmem:[%s2 + $0xf4] sm:$0xf]
    %v131 = vld [vmem:[%s2 + $0xf8] sm:$0xf]
    %v132 = vld [vmem:[%s2 + $0xfc] sm:$0xf]
    %v133 = vld [vmem:[%s2 + $0x100] sm:$0xf]
    %v134 = vld [vmem:[%s2 + $0x104] sm:$0xf]
    %v135 = vld [vmem:[%s2 + $0x108] sm:$0xf]
    %v136 = vld [vmem:[%s2 + $0x10c] sm:$0xf]
    %v137 = vld [vmem:[%s2 + $0x110] sm:$0xf]
    %v138 = vld [vmem:[%s2 + $0x114] sm:$0xf]
    %v139 = vld [vmem:[%s2 + $0x118] sm:$0xf]
    %v140 = vld [vmem:[%s2 + $0x11c] sm:$0xf]
    %v141 = vld [vmem:[%s2 + $0x120] sm:$0xf]
    %v142 = vld [vmem:[%s2 + $0x124] sm:$0xf]
    %v143 = vld [vmem:[%s2 + $0x128] sm:$0xf]
    %v144 = vld [vmem:[%s2 + $0x12c] sm:$0xf]
    %v145 = vld [vmem:[%s2 + $0x130] sm:$0xf]
    %v146 = vld [vmem:[%s2 + $0x134] sm:$0xf]
    %v147 = vld [vmem:[%s2 + $0x138] sm:$0xf]
    %v148 = vld [vmem:[%s2 + $0x13c] sm:$0xf]
    %v149 = vld [vmem:[%s2 + $0x140] sm:$0xf]
    %v150 = vld [vmem:[%s2 + $0x144] sm:$0xf]
    %v151 = vld [vmem:[%s2 + $0x148] sm:$0xf]
    %v152 = vld [vmem:[%s2 + $0x14c] sm:$0xf]
    %v153 = vld [vmem:[%s2 + $0x150] sm:$0xf]
    %v154 = vld [vmem:[%s2 + $0x154] sm:$0xf]
    %v155 = vld [vmem:[%s2 + $0x158] sm:$0xf]
    %v156 = vld [vmem:[%s2 + $0x15c] sm:$0xf]
    %v157 = vld [vmem:[%s2 + $0x160] sm:$0xf]
    %v158 = vld [vmem:[%s2 + $0x164] sm:$0xf]
    %v159 = vld [vmem:[%s2 + $0x168] sm:$0xf]
    %v160 = vld [vmem:[%s2 + $0x16c] sm:$0xf]
    %v161 = vld [vmem:[%s2 + $0x170] sm:$0xf]
    %v162 = vld [vmem:[%s2 + $0x174] sm:$0xf]
    %v163 = vld [vmem:[%s2 + $0x178] sm:$0xf]
    %v164 = vld [vmem:[%s2 + $0x17c] sm:$0xf]
    %v165 = vld [vmem:[%s2 + $0x180] sm:$0xf]
    %v166 = vld [vmem:[%s2 + $0x184] sm:$0xf]
    %v167 = vld [vmem:[%s2 + $0x188] sm:$0xf]
    %v168 = vld [vmem:[%s2 + $0x18c] sm:$0xf]
    %v169 = vld [vmem:[%s2 + $0x190] sm:$0xf]
    %v170 = vld [vmem:[%s2 + $0x194] sm:$0xf]
    %v171 = vld [vmem:[%s2 + $0x198] sm:$0xf]
    %v172 = vld [vmem:[%s2 + $0x19c] sm:$0xf]
    %v173 = vld [vmem:[%s2 + $0x1a0] sm:$0xf]
    %v174 = vld [vmem:[%s2 + $0x1a4] sm:$0xf]
    %v175 = vld [vmem:[%s2 + $0x1a8] sm:$0xf]
    %v176 = vld [vmem:[%s2 + $0x1ac] sm:$0xf]
    %v177 = vld [vmem:[%s2 + $0x1b0] sm:$0xf]
    %v178 = vld [vmem:[%s2 + $0x1b4] sm:$0xf]
    %v179 = vld [vmem:[%s2 + $0x1b8] sm:$0xf]
    %v180 = vld [vmem:[%s2 + $0x1bc] sm:$0xf]
    %v181 = vld [vmem:[%s2 + $0x1c0] sm:$0xf]
    %v182 = vld [vmem:[%s2 + $0x1c4] sm:$0xf]
    %v183 = vld [vmem:[%s2 + $0x1c8] sm:$0xf]
    %v184 = vld [vmem:[%s2 + $0x1cc] sm:$0xf]
    %v185 = vld [vmem:[%s2 + $0x1d0] sm:$0xf]
    %v186 = vld [vmem:[%s2 + $0x1d4] sm:$0xf]
    %v187 = vld [vmem:[%s2 + $0x1d8] sm:$0xf]
    %v188 = vld [vmem:[%s2 + $0x1dc] sm:$0xf]
    %v189 = vld [vmem:[%s2 + $0x1e0] sm:$0xf]
    %v190 = vld [vmem:[%s2 + $0x1e4] sm:$0xf]
    %v191 = vld [vmem:[%s2 + $0x1e8] sm:$0xf]
    %v192 = vld [vmem:[%s2 + $0x1ec] sm:$0xf]
    %v193 = vld [vmem:[%s2 + $0x1f0] sm:$0xf]
    %v194 = vld [vmem:[%s2 + $0x1f4] sm:$0xf]
    %v195 = vld [vmem:[%s2 + $0x1f8] sm:$0xf]
    %v196 = vld [vmem:[%s2 + $0x1fc] sm:$0xf]
    %v197 = vld [vmem:[%s3] sm:$0x1]
    %v199 = vlaneseq
    %v200 = vshrl.u32 %v199, 7
    %v201 = vsub.s32 0, %v200
    %v202 = vrot.slane %v197, %v201
    %v332 = vunpack.c.l.b16 %v69
    %v333 = vunpack.c.l.b16 %v70
    %v334 = vunpack.c.l.b16 %v71
    %v335 = vunpack.c.l.b16 %v72
    %v336 = vunpack.c.l.b16 %v73
    %v337 = vunpack.c.l.b16 %v74
    %v338 = vunpack.c.l.b16 %v75
    %v339 = vunpack.c.l.b16 %v76
    %v340 = vunpack.c.l.b16 %v77
    %v341 = vunpack.c.l.b16 %v78
    %v342 = vunpack.c.l.b16 %v79
    %v343 = vunpack.c.l.b16 %v80
    %v344 = vunpack.c.l.b16 %v81
    %v345 = vunpack.c.l.b16 %v82
    %v346 = vunpack.c.l.b16 %v83
    %v347 = vunpack.c.l.b16 %v84
    %v348 = vunpack.c.l.b16 %v85
    %v349 = vunpack.c.l.b16 %v86
    %v350 = vunpack.c.l.b16 %v87
    %v351 = vunpack.c.l.b16 %v88
    %v352 = vunpack.c.l.b16 %v89
    %v353 = vunpack.c.l.b16 %v90
    %v354 = vunpack.c.l.b16 %v91
    %v355 = vunpack.c.l.b16 %v92
    %v356 = vunpack.c.l.b16 %v93
    %v357 = vunpack.c.l.b16 %v94
    %v358 = vunpack.c.l.b16 %v95
    %v359 = vunpack.c.l.b16 %v96
    %v360 = vunpack.c.l.b16 %v97
    %v361 = vunpack.c.l.b16 %v98
    %v362 = vunpack.c.l.b16 %v99
    %v363 = vunpack.c.l.b16 %v100
    %v364 = vunpack.c.l.b16 %v101
    %v365 = vunpack.c.l.b16 %v102
    %v366 = vunpack.c.l.b16 %v103
    %v367 = vunpack.c.l.b16 %v104
    %v368 = vunpack.c.l.b16 %v105
    %v369 = vunpack.c.l.b16 %v106
    %v370 = vunpack.c.l.b16 %v107
    %v371 = vunpack.c.l.b16 %v108
    %v372 = vunpack.c.l.b16 %v109
    %v373 = vunpack.c.l.b16 %v110
    %v374 = vunpack.c.l.b16 %v111
    %v375 = vunpack.c.l.b16 %v112
    %v376 = vunpack.c.l.b16 %v113
    %v377 = vunpack.c.l.b16 %v114
    %v378 = vunpack.c.l.b16 %v115
    %v379 = vunpack.c.l.b16 %v116
    %v380 = vunpack.c.l.b16 %v117
    %v381 = vunpack.c.l.b16 %v118
    %v382 = vunpack.c.l.b16 %v119
    %v383 = vunpack.c.l.b16 %v120
    %v384 = vunpack.c.l.b16 %v121
    %v385 = vunpack.c.l.b16 %v122
    %v386 = vunpack.c.l.b16 %v123
    %v387 = vunpack.c.l.b16 %v124
    %v388 = vunpack.c.l.b16 %v125
    %v389 = vunpack.c.l.b16 %v126
    %v390 = vunpack.c.l.b16 %v127
    %v391 = vunpack.c.l.b16 %v128
    %v392 = vunpack.c.l.b16 %v129
    %v393 = vunpack.c.l.b16 %v130
    %v394 = vunpack.c.l.b16 %v131
    %v395 = vunpack.c.l.b16 %v132
    %v396 = vunpack.c.l.b16 %v133
    %v397 = vunpack.c.l.b16 %v134
    %v398 = vunpack.c.l.b16 %v135
    %v399 = vunpack.c.l.b16 %v136
    %v400 = vunpack.c.l.b16 %v137
    %v401 = vunpack.c.l.b16 %v138
    %v402 = vunpack.c.l.b16 %v139
    %v403 = vunpack.c.l.b16 %v140
    %v404 = vunpack.c.l.b16 %v141
    %v405 = vunpack.c.l.b16 %v142
    %v406 = vunpack.c.l.b16 %v143
    %v407 = vunpack.c.l.b16 %v144
    %v408 = vunpack.c.l.b16 %v145
    %v409 = vunpack.c.l.b16 %v146
    %v410 = vunpack.c.l.b16 %v147
    %v411 = vunpack.c.l.b16 %v148
    %v412 = vunpack.c.l.b16 %v149
    %v413 = vunpack.c.l.b16 %v150
    %v414 = vunpack.c.l.b16 %v151
    %v415 = vunpack.c.l.b16 %v152
    %v416 = vunpack.c.l.b16 %v153
    %v417 = vunpack.c.l.b16 %v154
    %v418 = vunpack.c.l.b16 %v155
    %v419 = vunpack.c.l.b16 %v156
    %v420 = vunpack.c.l.b16 %v157
    %v421 = vunpack.c.l.b16 %v158
    %v422 = vunpack.c.l.b16 %v159
    %v423 = vunpack.c.l.b16 %v160
    %v424 = vunpack.c.l.b16 %v161
    %v425 = vunpack.c.l.b16 %v162
    %v426 = vunpack.c.l.b16 %v163
    %v427 = vunpack.c.l.b16 %v164
    %v428 = vunpack.c.l.b16 %v165
    %v429 = vunpack.c.l.b16 %v166
    %v430 = vunpack.c.l.b16 %v167
    %v431 = vunpack.c.l.b16 %v168
    %v432 = vunpack.c.l.b16 %v169
    %v433 = vunpack.c.l.b16 %v170
    %v434 = vunpack.c.l.b16 %v171
    %v435 = vunpack.c.l.b16 %v172
    %v436 = vunpack.c.l.b16 %v173
    %v437 = vunpack.c.l.b16 %v174
    %v438 = vunpack.c.l.b16 %v175
    %v439 = vunpack.c.l.b16 %v176
    %v440 = vunpack.c.l.b16 %v177
    %v441 = vunpack.c.l.b16 %v178
    %v442 = vunpack.c.l.b16 %v179
    %v443 = vunpack.c.l.b16 %v180
    %v444 = vunpack.c.l.b16 %v181
    %v445 = vunpack.c.l.b16 %v182
    %v446 = vunpack.c.l.b16 %v183
    %v447 = vunpack.c.l.b16 %v184
    %v448 = vunpack.c.l.b16 %v185
    %v449 = vunpack.c.l.b16 %v186
    %v450 = vunpack.c.l.b16 %v187
    %v451 = vunpack.c.l.b16 %v188
    %v452 = vunpack.c.l.b16 %v189
    %v453 = vunpack.c.l.b16 %v190
    %v454 = vunpack.c.l.b16 %v191
    %v455 = vunpack.c.l.b16 %v192
    %v456 = vunpack.c.l.b16 %v193
    %v457 = vunpack.c.l.b16 %v194
    %v458 = vunpack.c.l.b16 %v195
    %v459 = vunpack.c.l.b16 %v196
    %v460 = vpack.c.b16 %v333, %v332
    %v461 = vpack.c.b16 %v335, %v334
    %v462 = vpack.c.b16 %v337, %v336
    %v463 = vpack.c.b16 %v339, %v338
    %v464 = vpack.c.b16 %v341, %v340
    %v465 = vpack.c.b16 %v343, %v342
    %v466 = vpack.c.b16 %v345, %v344
    %v467 = vpack.c.b16 %v347, %v346
    %v468 = vpack.c.b16 %v349, %v348
    %v469 = vpack.c.b16 %v351, %v350
    %v470 = vpack.c.b16 %v353, %v352
    %v471 = vpack.c.b16 %v355, %v354
    %v472 = vpack.c.b16 %v357, %v356
    %v473 = vpack.c.b16 %v359, %v358
    %v474 = vpack.c.b16 %v361, %v360
    %v475 = vpack.c.b16 %v363, %v362
    %v476 = vpack.c.b16 %v365, %v364
    %v477 = vpack.c.b16 %v367, %v366
    %v478 = vpack.c.b16 %v369, %v368
    %v479 = vpack.c.b16 %v371, %v370
    %v480 = vpack.c.b16 %v373, %v372
    %v481 = vpack.c.b16 %v375, %v374
    %v482 = vpack.c.b16 %v377, %v376
    %v483 = vpack.c.b16 %v379, %v378
    %v484 = vpack.c.b16 %v381, %v380
    %v485 = vpack.c.b16 %v383, %v382
    %v486 = vpack.c.b16 %v385, %v384
    %v487 = vpack.c.b16 %v387, %v386
    %v488 = vpack.c.b16 %v389, %v388
    %v489 = vpack.c.b16 %v391, %v390
    %v490 = vpack.c.b16 %v393, %v392
    %v491 = vpack.c.b16 %v395, %v394
    %v492 = vpack.c.b16 %v397, %v396
    %v493 = vpack.c.b16 %v399, %v398
    %v494 = vpack.c.b16 %v401, %v400
    %v495 = vpack.c.b16 %v403, %v402
    %v496 = vpack.c.b16 %v405, %v404
    %v497 = vpack.c.b16 %v407, %v406
    %v498 = vpack.c.b16 %v409, %v408
    %v499 = vpack.c.b16 %v411, %v410
    %v500 = vpack.c.b16 %v413, %v412
    %v501 = vpack.c.b16 %v415, %v414
    %v502 = vpack.c.b16 %v417, %v416
    %v503 = vpack.c.b16 %v419, %v418
    %v504 = vpack.c.b16 %v421, %v420
    %v505 = vpack.c.b16 %v423, %v422
    %v506 = vpack.c.b16 %v425, %v424
    %v507 = vpack.c.b16 %v427, %v426
    %v508 = vpack.c.b16 %v429, %v428
    %v509 = vpack.c.b16 %v431, %v430
    %v510 = vpack.c.b16 %v433, %v432
    %v511 = vpack.c.b16 %v435, %v434
    %v512 = vpack.c.b16 %v437, %v436
    %v513 = vpack.c.b16 %v439, %v438
    %v514 = vpack.c.b16 %v441, %v440
    %v515 = vpack.c.b16 %v443, %v442
    %v516 = vpack.c.b16 %v445, %v444
    %v517 = vpack.c.b16 %v447, %v446
    %v518 = vpack.c.b16 %v449, %v448
    %v519 = vpack.c.b16 %v451, %v450
    %v520 = vpack.c.b16 %v453, %v452
    %v521 = vpack.c.b16 %v455, %v454
    %v522 = vpack.c.b16 %v457, %v456
    %v523 = vpack.c.b16 %v459, %v458
    %588 = vmatprep.subr.bf16.mxu0 0
    %589 = vmatpush1.bf16.msra.mxu0 %v460
    %590 = vmatprep.subr.bf16.mxu0 0
    %591 = vmatpush1.bf16.msra.mxu0 %v461
    %592 = vmatprep.subr.bf16.mxu0 0
    %593 = vmatpush1.bf16.msra.mxu0 %v462
    %594 = vmatprep.subr.bf16.mxu0 0
    %595 = vmatpush1.bf16.msra.mxu0 %v463
    %596 = vmatprep.subr.bf16.mxu0 0
    %597 = vmatpush1.bf16.msra.mxu0 %v464
    %598 = vmatprep.subr.bf16.mxu0 0
    %599 = vmatpush1.bf16.msra.mxu0 %v465
    %600 = vmatprep.subr.bf16.mxu0 0
    %601 = vmatpush1.bf16.msra.mxu0 %v466
    %602 = vmatprep.subr.bf16.mxu0 0
    %603 = vmatpush1.bf16.msra.mxu0 %v467
    %604 = vmatprep.subr.bf16.mxu0 0
    %605 = vmatpush1.bf16.msra.mxu0 %v468
    %606 = vmatprep.subr.bf16.mxu0 0
    %607 = vmatpush1.bf16.msra.mxu0 %v469
    %608 = vmatprep.subr.bf16.mxu0 0
    %609 = vmatpush1.bf16.msra.mxu0 %v470
    %610 = vmatprep.subr.bf16.mxu0 0
    %611 = vmatpush1.bf16.msra.mxu0 %v471
    %612 = vmatprep.subr.bf16.mxu0 0
    %613 = vmatpush1.bf16.msra.mxu0 %v472
    %614 = vmatprep.subr.bf16.mxu0 0
    %615 = vmatpush1.bf16.msra.mxu0 %v473
    %616 = vmatprep.subr.bf16.mxu0 0
    %617 = vmatpush1.bf16.msra.mxu0 %v474
    %618 = vmatprep.subr.bf16.mxu0 0
    %619 = vmatpush1.bf16.msra.mxu0 %v475
    %620 = vmatprep.mubr.bf16.mxu0 %v62
    %621 = vmatmul.mubr.bf16.gmra.mrb[0].mxu0 %v61
    %v622 = vpop.f32.mrb[0].mxu0
    %v623 = vadd.f32 %v202, %v622
    %v624 = vpop.f32.mrb[0].mxu0
    %v625 = vpop.f32.mrb[0].mxu0
    %v626 = vpop.f32.mrb[0].mxu0
    %627 = vdwg.mxu0
    %628 = vmatprep.subr.bf16.mxu0 0
    %629 = vmatpush1.bf16.msra.mxu0 %v476
    %630 = vmatprep.subr.bf16.mxu0 0
    %631 = vmatpush1.bf16.msra.mxu0 %v477
    %632 = vmatprep.subr.bf16.mxu0 0
    %633 = vmatpush1.bf16.msra.mxu0 %v478
    %634 = vmatprep.subr.bf16.mxu0 0
    %635 = vmatpush1.bf16.msra.mxu0 %v479
    %636 = vmatprep.subr.bf16.mxu0 0
    %637 = vmatpush1.bf16.msra.mxu0 %v480
    %638 = vmatprep.subr.bf16.mxu0 0
    %639 = vmatpush1.bf16.msra.mxu0 %v481
    %640 = vmatprep.subr.bf16.mxu0 0
    %641 = vmatpush1.bf16.msra.mxu0 %v482
    %642 = vmatprep.subr.bf16.mxu0 0
    %643 = vmatpush1.bf16.msra.mxu0 %v483
    %644 = vmatprep.subr.bf16.mxu0 0
    %645 = vmatpush1.bf16.msra.mxu0 %v484
    %646 = vmatprep.subr.bf16.mxu0 0
    %647 = vmatpush1.bf16.msra.mxu0 %v485
    %648 = vmatprep.subr.bf16.mxu0 0
    %649 = vmatpush1.bf16.msra.mxu0 %v486
    %650 = vmatprep.subr.bf16.mxu0 0
    %651 = vmatpush1.bf16.msra.mxu0 %v487
    %652 = vmatprep.subr.bf16.mxu0 0
    %653 = vmatpush1.bf16.msra.mxu0 %v488
    %654 = vmatprep.subr.bf16.mxu0 0
    %655 = vmatpush1.bf16.msra.mxu0 %v489
    %656 = vmatprep.subr.bf16.mxu0 0
    %657 = vmatpush1.bf16.msra.mxu0 %v490
    %658 = vmatprep.subr.bf16.mxu0 0
    %659 = vmatpush1.bf16.msra.mxu0 %v491
    %660 = vmatprep.mubr.bf16.mxu0 %v64
    %661 = vmatmul.mubr.bf16.gmra.mrb[0].mxu0 %v63
    %v662 = vpop.f32.mrb[0].mxu0
    %v663 = vadd.f32 %v623, %v662
    %v664 = vpop.f32.mrb[0].mxu0
    %v665 = vpop.f32.mrb[0].mxu0
    %v666 = vpop.f32.mrb[0].mxu0
    %667 = vdwg.mxu0
    %668 = vmatprep.subr.bf16.mxu0 0
    %669 = vmatpush1.bf16.msra.mxu0 %v492
    %670 = vmatprep.subr.bf16.mxu0 0
    %671 = vmatpush1.bf16.msra.mxu0 %v493
    %672 = vmatprep.subr.bf16.mxu0 0
    %673 = vmatpush1.bf16.msra.mxu0 %v494
    %674 = vmatprep.subr.bf16.mxu0 0
    %675 = vmatpush1.bf16.msra.mxu0 %v495
    %676 = vmatprep.subr.bf16.mxu0 0
    %677 = vmatpush1.bf16.msra.mxu0 %v496
    %678 = vmatprep.subr.bf16.mxu0 0
    %679 = vmatpush1.bf16.msra.mxu0 %v497
    %680 = vmatprep.subr.bf16.mxu0 0
    %681 = vmatpush1.bf16.msra.mxu0 %v498
    %682 = vmatprep.subr.bf16.mxu0 0
    %683 = vmatpush1.bf16.msra.mxu0 %v499
    %684 = vmatprep.subr.bf16.mxu0 0
    %685 = vmatpush1.bf16.msra.mxu0 %v500
    %686 = vmatprep.subr.bf16.mxu0 0
    %687 = vmatpush1.bf16.msra.mxu0 %v501
    %688 = vmatprep.subr.bf16.mxu0 0
    %689 = vmatpush1.bf16.msra.mxu0 %v502
    %690 = vmatprep.subr.bf16.mxu0 0
    %691 = vmatpush1.bf16.msra.mxu0 %v503
    %692 = vmatprep.subr.bf16.mxu0 0
    %693 = vmatpush1.bf16.msra.mxu0 %v504
    %694 = vmatprep.subr.bf16.mxu0 0
    %695 = vmatpush1.bf16.msra.mxu0 %v505
    %696 = vmatprep.subr.bf16.mxu0 0
    %697 = vmatpush1.bf16.msra.mxu0 %v506
    %698 = vmatprep.subr.bf16.mxu0 0
    %699 = vmatpush1.bf16.msra.mxu0 %v507
    %700 = vmatprep.mubr.bf16.mxu0 %v66
    %701 = vmatmul.mubr.bf16.gmra.mrb[0].mxu0 %v65
    %v702 = vpop.f32.mrb[0].mxu0
    %v703 = vadd.f32 %v663, %v702
    %v704 = vpop.f32.mrb[0].mxu0
    %v705 = vpop.f32.mrb[0].mxu0
    %v706 = vpop.f32.mrb[0].mxu0
    %707 = vdwg.mxu0
    %708 = vmatprep.subr.bf16.mxu0 0
    %709 = vmatpush1.bf16.msra.mxu0 %v508
    %710 = vmatprep.subr.bf16.mxu0 0
    %711 = vmatpush1.bf16.msra.mxu0 %v509
    %712 = vmatprep.subr.bf16.mxu0 0
    %713 = vmatpush1.bf16.msra.mxu0 %v510
    %714 = vmatprep.subr.bf16.mxu0 0
    %715 = vmatpush1.bf16.msra.mxu0 %v511
    %716 = vmatprep.subr.bf16.mxu0 0
    %717 = vmatpush1.bf16.msra.mxu0 %v512
    %718 = vmatprep.subr.bf16.mxu0 0
    %719 = vmatpush1.bf16.msra.mxu0 %v513
    %720 = vmatprep.subr.bf16.mxu0 0
    %721 = vmatpush1.bf16.msra.mxu0 %v514
    %722 = vmatprep.subr.bf16.mxu0 0
    %723 = vmatpush1.bf16.msra.mxu0 %v515
    %724 = vmatprep.subr.bf16.mxu0 0
    %725 = vmatpush1.bf16.msra.mxu0 %v516
    %726 = vmatprep.subr.bf16.mxu0 0
    %727 = vmatpush1.bf16.msra.mxu0 %v517
    %728 = vmatprep.subr.bf16.mxu0 0
    %729 = vmatpush1.bf16.msra.mxu0 %v518
    %730 = vmatprep.subr.bf16.mxu0 0
    %731 = vmatpush1.bf16.msra.mxu0 %v519
    %732 = vmatprep.subr.bf16.mxu0 0
    %733 = vmatpush1.bf16.msra.mxu0 %v520
    %734 = vmatprep.subr.bf16.mxu0 0
    %735 = vmatpush1.bf16.msra.mxu0 %v521
    %736 = vmatprep.subr.bf16.mxu0 0
    %737 = vmatpush1.bf16.msra.mxu0 %v522
    %738 = vmatprep.subr.bf16.mxu0 0
    %739 = vmatpush1.bf16.msra.mxu0 %v523
    %740 = vmatprep.mubr.bf16.mxu0 %v68
    %741 = vmatmul.mubr.bf16.gmra.mrb[0].mxu0 %v67
    %v742 = vpop.f32.mrb[0].mxu0
    %v743 = vadd.f32 %v703, %v742
    %v744 = vpop.f32.mrb[0].mxu0
    %v745 = vpop.f32.mrb[0].mxu0
    %v746 = vpop.f32.mrb[0].mxu0
    %747 = vdwg.mxu0
    %v748 = vtanh.pop %v743
    %v749 = vpack.c.bf16 %v748, %v748
    %v750 = vld [vmem:[%s4] sm:$0xf]
    %v751 = vld [vmem:[%s4 + $0x4] sm:$0xf]
    %v752 = vld [vmem:[%s4 + $0x8] sm:$0xf]
    %v753 = vld [vmem:[%s4 + $0xc] sm:$0xf]
    %v754 = vld [vmem:[%s4 + $0x10] sm:$0xf]
    %v755 = vld [vmem:[%s4 + $0x14] sm:$0xf]
    %v756 = vld [vmem:[%s4 + $0x18] sm:$0xf]
    %v757 = vld [vmem:[%s4 + $0x1c] sm:$0xf]
    %v758 = vld [vmem:[%s5] sm:$0x1]
    %v760 = vlaneseq
    %v761 = vshrl.u32 %v760, 7
    %v762 = vsub.s32 0, %v761
    %v763 = vrot.slane %v758, %v762
    %v773 = vunpack.c.l.b16 %v750
    %v774 = vunpack.c.l.b16 %v751
    %v775 = vunpack.c.l.b16 %v752
    %v776 = vunpack.c.l.b16 %v753
    %v777 = vunpack.c.l.b16 %v754
    %v778 = vunpack.c.l.b16 %v755
    %v779 = vunpack.c.l.b16 %v756
    %v780 = vunpack.c.l.b16 %v757
    %v781 = vpack.c.b16 %v774, %v773
    %v782 = vpack.c.b16 %v776, %v775
    %v783 = vpack.c.b16 %v778, %v777
    %v784 = vpack.c.b16 %v780, %v779
    %vm789 = vcmask 523264
    %v791 = vsel %vm789, %v749, 0
    %793 = vmatprep.subr.bf16.mxu0 0
    %794 = vmatpush1.bf16.msra.mxu0 %v781
    %795 = vmatprep.subr.bf16.mxu0 0
    %796 = vmatpush1.bf16.msra.mxu0 %v782
    %797 = vmatprep.subr.bf16.mxu0 0
    %798 = vmatpush1.bf16.msra.mxu0 %v783
    %799 = vmatprep.subr.bf16.mxu0 0
    %800 = vmatpush1.bf16.msra.mxu0 %v784
    %801 = vmatprep.subr.bf16.mxu0 0
    %802 = vmatpush1.bf16.msra.mxu0 0
    %803 = vmatprep.subr.bf16.mxu0 0
    %804 = vmatpush1.bf16.msra.mxu0 0
    %805 = vmatprep.subr.bf16.mxu0 0
    %806 = vmatpush1.bf16.msra.mxu0 0
    %807 = vmatprep.subr.bf16.mxu0 0
    %808 = vmatpush1.bf16.msra.mxu0 0
    %809 = vmatprep.subr.bf16.mxu0 0
    %810 = vmatpush1.bf16.msra.mxu0 0
    %811 = vmatprep.subr.bf16.mxu0 0
    %812 = vmatpush1.bf16.msra.mxu0 0
    %813 = vmatprep.subr.bf16.mxu0 0
    %814 = vmatpush1.bf16.msra.mxu0 0
    %815 = vmatprep.subr.bf16.mxu0 0
    %816 = vmatpush1.bf16.msra.mxu0 0
    %817 = vmatprep.subr.bf16.mxu0 0
    %818 = vmatpush1.bf16.msra.mxu0 0
    %819 = vmatprep.subr.bf16.mxu0 0
    %820 = vmatpush1.bf16.msra.mxu0 0
    %821 = vmatprep.subr.bf16.mxu0 0
    %822 = vmatpush1.bf16.msra.mxu0 0
    %823 = vmatprep.subr.bf16.mxu0 0
    %824 = vmatpush1.bf16.msra.mxu0 0
    %825 = vmatprep.mubr.bf16.mxu0 0
    %826 = vmatmul.mubr.bf16.gmra.mrb[0].mxu0 %v791
    %v827 = vpop.f32.mrb[0].mxu0
    %v828 = vadd.f32 %v763, %v827
    %v829 = vpop.f32.mrb[0].mxu0
    %v830 = vpop.f32.mrb[0].mxu0
    %v831 = vpop.f32.mrb[0].mxu0
    %832 = vdwg.mxu0
    %v833 = vmul.f32 %v828, 0.5
    %v834 = vmul.f32 %v833, 1.442695
    %v835 = vpow.pop %v834
    %v836 = vld [vmem:[%s1] sm:$0xff]
    %838 = vrot.lane.b32.xlu0 %v836, 8
    %v839 = vpop.permute.xlu0 %838
    %v841 = vmul.f32 %v835, %v839
    %843 = vrot.lane.b32.xlu0 %v841, 120
    %v844 = vpop.permute.xlu0 %843
    %v846 = vadd.f32 %v828, %v844
    %v847 = vpack.c.bf16 %v846, %v846
    %v848 = vld [vmem:[%s6] sm:$0xf]
    %v849 = vld [vmem:[%s7] sm:$0x1]
    %v851 = vlaneseq
    %v852 = vshrl.u32 %v851, 7
    %v853 = vsub.s32 0, %v852
    %v854 = vrot.slane %v849, %v853
    %vm856 = vcmask 64512
    %v858 = vsel %vm856, %v847, 0
    %vm860 = vcmask 1043456
    %v862 = vsel %vm860, %v848, 0
    %864 = vmatprep.subr.bf16.mxu0 0
    %865 = vmatpush1.bf16.msra.mxu0 %v862
    %866 = vmatprep.subr.bf16.mxu0 0
    %867 = vmatpush1.bf16.msra.mxu0 0
    %868 = vmatprep.subr.bf16.mxu0 0
    %869 = vmatpush1.bf16.msra.mxu0 0
    %870 = vmatprep.subr.bf16.mxu0 0
    %871 = vmatpush1.bf16.msra.mxu0 0
    %872 = vmatprep.subr.bf16.mxu0 0
    %873 = vmatpush1.bf16.msra.mxu0 0
    %874 = vmatprep.subr.bf16.mxu0 0
    %875 = vmatpush1.bf16.msra.mxu0 0
    %876 = vmatprep.subr.bf16.mxu0 0
    %877 = vmatpush1.bf16.msra.mxu0 0
    %878 = vmatprep.subr.bf16.mxu0 0
    %879 = vmatpush1.bf16.msra.mxu0 0
    %880 = vmatprep.subr.bf16.mxu0 0
    %881 = vmatpush1.bf16.msra.mxu0 0
    %882 = vmatprep.subr.bf16.mxu0 0
    %883 = vmatpush1.bf16.msra.mxu0 0
    %884 = vmatprep.subr.bf16.mxu0 0
    %885 = vmatpush1.bf16.msra.mxu0 0
    %886 = vmatprep.subr.bf16.mxu0 0
    %887 = vmatpush1.bf16.msra.mxu0 0
    %888 = vmatprep.subr.bf16.mxu0 0
    %889 = vmatpush1.bf16.msra.mxu0 0
    %890 = vmatprep.subr.bf16.mxu0 0
    %891 = vmatpush1.bf16.msra.mxu0 0
    %892 = vmatprep.subr.bf16.mxu0 0
    %893 = vmatpush1.bf16.msra.mxu0 0
    %894 = vmatprep.subr.bf16.mxu0 0
    %895 = vmatpush1.bf16.msra.mxu0 0
    %896 = vmatprep.mubr.bf16.mxu0 0
    %897 = vmatmul.mubr.bf16.gmra.mrb[0].mxu0 %v858
    %v898 = vpop.f32.mrb[0].mxu0
    %v899 = vadd.f32 %v854, %v898
    %v900 = vpop.f32.mrb[0].mxu0
    %v901 = vpop.f32.mrb[0].mxu0
    %v902 = vpop.f32.mrb[0].mxu0
    %903 = vdwg.mxu0
    %v904 = vtanh.pop %v899
    %v905 = vpack.c.bf16 %v904, %v904
    %v906 = vld [vmem:[%s8] sm:$0xff]
    %v907 = vld [vmem:[%s8 + $0x8] sm:$0xff]
    %v908 = vld [vmem:[%s8 + $0x10] sm:$0xff]
    %v909 = vld [vmem:[%s8 + $0x18] sm:$0xff]
    %v910 = vld [vmem:[%s8 + $0x20] sm:$0xff]
    %v911 = vld [vmem:[%s8 + $0x28] sm:$0xff]
    %v912 = vld [vmem:[%s8 + $0x30] sm:$0xff]
    %v913 = vld [vmem:[%s8 + $0x38] sm:$0xff]
    %v914 = vld [vmem:[%s8 + $0x40] sm:$0xff]
    %v915 = vld [vmem:[%s8 + $0x48] sm:$0xff]
    %v916 = vld [vmem:[%s8 + $0x50] sm:$0xff]
    %v917 = vld [vmem:[%s8 + $0x58] sm:$0xff]
    %v918 = vld [vmem:[%s8 + $0x60] sm:$0xff]
    %v919 = vld [vmem:[%s8 + $0x68] sm:$0xff]
    %v920 = vld [vmem:[%s8 + $0x70] sm:$0xff]
    %v921 = vld [vmem:[%s8 + $0x78] sm:$0xff]
    %v922 = vld [vmem:[%s8 + $0x80] sm:$0xff]
    %v923 = vld [vmem:[%s8 + $0x88] sm:$0xff]
    %v924 = vld [vmem:[%s8 + $0x90] sm:$0xff]
    %v925 = vld [vmem:[%s8 + $0x98] sm:$0xff]
    %v926 = vld [vmem:[%s8 + $0xa0] sm:$0xff]
    %v927 = vld [vmem:[%s8 + $0xa8] sm:$0xff]
    %v928 = vld [vmem:[%s8 + $0xb0] sm:$0xff]
    %v929 = vld [vmem:[%s8 + $0xb8] sm:$0xff]
    %v930 = vld [vmem:[%s8 + $0xc0] sm:$0xff]
    %v931 = vld [vmem:[%s8 + $0xc8] sm:$0xff]
    %v932 = vld [vmem:[%s8 + $0xd0] sm:$0xff]
    %v933 = vld [vmem:[%s8 + $0xd8] sm:$0xff]
    %v934 = vld [vmem:[%s8 + $0xe0] sm:$0xff]
    %v935 = vld [vmem:[%s8 + $0xe8] sm:$0xff]
    %v936 = vld [vmem:[%s8 + $0xf0] sm:$0xff]
    %v937 = vld [vmem:[%s8 + $0xf8] sm:$0xff]
    %v938 = vld [vmem:[%s9] sm:$0xff]
    %v940 = vlaneseq
    %v941 = vshrl.u32 %v940, 7
    %v942 = vsub.s32 0, %v941
    %v943 = vrot.slane %v938, %v942
    %v944 = vlaneseq
    %v945 = vshrl.u32 %v944, 7
    %v946 = vsub.s32 1, %v945
    %v947 = vrot.slane %v938, %v946
    %v948 = vlaneseq
    %v949 = vshrl.u32 %v948, 7
    %v950 = vsub.s32 2, %v949
    %v951 = vrot.slane %v938, %v950
    %v952 = vlaneseq
    %v953 = vshrl.u32 %v952, 7
    %v954 = vsub.s32 3, %v953
    %v955 = vrot.slane %v938, %v954
    %v956 = vlaneseq
    %v957 = vshrl.u32 %v956, 7
    %v958 = vsub.s32 4, %v957
    %v959 = vrot.slane %v938, %v958
    %v960 = vlaneseq
    %v961 = vshrl.u32 %v960, 7
    %v962 = vsub.s32 5, %v961
    %v963 = vrot.slane %v938, %v962
    %v964 = vlaneseq
    %v965 = vshrl.u32 %v964, 7
    %v966 = vsub.s32 6, %v965
    %v967 = vrot.slane %v938, %v966
    %v968 = vlaneseq
    %v969 = vshrl.u32 %v968, 7
    %v970 = vsub.s32 7, %v969
    %v971 = vrot.slane %v938, %v970
    %v1012 = vunpack.c.l.b16 %v906
    %v1013 = vunpack.c.h.b16 %v906
    %v1014 = vunpack.c.l.b16 %v907
    %v1015 = vunpack.c.h.b16 %v907
    %v1016 = vunpack.c.l.b16 %v908
    %v1017 = vunpack.c.h.b16 %v908
    %v1018 = vunpack.c.l.b16 %v909
    %v1019 = vunpack.c.h.b16 %v909
    %v1020 = vunpack.c.l.b16 %v910
    %v1021 = vunpack.c.h.b16 %v910
    %v1022 = vunpack.c.l.b16 %v911
    %v1023 = vunpack.c.h.b16 %v911
    %v1024 = vunpack.c.l.b16 %v912
    %v1025 = vunpack.c.h.b16 %v912
    %v1026 = vunpack.c.l.b16 %v913
    %v1027 = vunpack.c.h.b16 %v913
    %v1028 = vunpack.c.l.b16 %v914
    %v1029 = vunpack.c.h.b16 %v914
    %v1030 = vunpack.c.l.b16 %v915
    %v1031 = vunpack.c.h.b16 %v915
    %v1032 = vunpack.c.l.b16 %v916
    %v1033 = vunpack.c.h.b16 %v916
    %v1034 = vunpack.c.l.b16 %v917
    %v1035 = vunpack.c.h.b16 %v917
    %v1036 = vunpack.c.l.b16 %v918
    %v1037 = vunpack.c.h.b16 %v918
    %v1038 = vunpack.c.l.b16 %v919
    %v1039 = vunpack.c.h.b16 %v919
    %v1040 = vunpack.c.l.b16 %v920
    %v1041 = vunpack.c.h.b16 %v920
    %v1042 = vunpack.c.l.b16 %v921
    %v1043 = vunpack.c.h.b16 %v921
    %v1044 = vunpack.c.l.b16 %v922
    %v1045 = vunpack.c.h.b16 %v922
    %v1046 = vunpack.c.l.b16 %v923
    %v1047 = vunpack.c.h.b16 %v923
    %v1048 = vunpack.c.l.b16 %v924
    %v1049 = vunpack.c.h.b16 %v924
    %v1050 = vunpack.c.l.b16 %v925
    %v1051 = vunpack.c.h.b16 %v925
    %v1052 = vunpack.c.l.b16 %v926
    %v1053 = vunpack.c.h.b16 %v926
    %v1054 = vunpack.c.l.b16 %v927
    %v1055 = vunpack.c.h.b16 %v927
    %v1056 = vunpack.c.l.b16 %v928
    %v1057 = vunpack.c.h.b16 %v928
    %v1058 = vunpack.c.l.b16 %v929
    %v1059 = vunpack.c.h.b16 %v929
    %v1060 = vunpack.c.l.b16 %v930
    %v1061 = vunpack.c.h.b16 %v930
    %v1062 = vunpack.c.l.b16 %v931
    %v1063 = vunpack.c.h.b16 %v931
    %v1064 = vunpack.c.l.b16 %v932
    %v1065 = vunpack.c.h.b16 %v932
    %v1066 = vunpack.c.l.b16 %v933
    %v1067 = vunpack.c.h.b16 %v933
    %v1068 = vunpack.c.l.b16 %v934
    %v1069 = vunpack.c.h.b16 %v934
    %v1070 = vunpack.c.l.b16 %v935
    %v1071 = vunpack.c.h.b16 %v935
    %v1072 = vunpack.c.l.b16 %v936
    %v1073 = vunpack.c.h.b16 %v936
    %v1074 = vunpack.c.l.b16 %v937
    %v1075 = vunpack.c.h.b16 %v937
    %v1076 = vpack.c.b16 %v1020, %v1012
    %v1077 = vpack.c.b16 %v1021, %v1013
    %v1078 = vpack.c.b16 %v1022, %v1014
    %v1079 = vpack.c.b16 %v1023, %v1015
    %v1080 = vpack.c.b16 %v1024, %v1016
    %v1081 = vpack.c.b16 %v1025, %v1017
    %v1082 = vpack.c.b16 %v1026, %v1018
    %v1083 = vpack.c.b16 %v1027, %v1019
    %v1084 = vpack.c.b16 %v1036, %v1028
    %v1085 = vpack.c.b16 %v1037, %v1029
    %v1086 = vpack.c.b16 %v1038, %v1030
    %v1087 = vpack.c.b16 %v1039, %v1031
    %v1088 = vpack.c.b16 %v1040, %v1032
    %v1089 = vpack.c.b16 %v1041, %v1033
    %v1090 = vpack.c.b16 %v1042, %v1034
    %v1091 = vpack.c.b16 %v1043, %v1035
    %v1092 = vpack.c.b16 %v1052, %v1044
    %v1093 = vpack.c.b16 %v1053, %v1045
    %v1094 = vpack.c.b16 %v1054, %v1046
    %v1095 = vpack.c.b16 %v1055, %v1047
    %v1096 = vpack.c.b16 %v1056, %v1048
    %v1097 = vpack.c.b16 %v1057, %v1049
    %v1098 = vpack.c.b16 %v1058, %v1050
    %v1099 = vpack.c.b16 %v1059, %v1051
    %v1100 = vpack.c.b16 %v1068, %v1060
    %v1101 = vpack.c.b16 %v1069, %v1061
    %v1102 = vpack.c.b16 %v1070, %v1062
    %v1103 = vpack.c.b16 %v1071, %v1063
    %v1104 = vpack.c.b16 %v1072, %v1064
    %v1105 = vpack.c.b16 %v1073, %v1065
    %v1106 = vpack.c.b16 %v1074, %v1066
    %v1107 = vpack.c.b16 %v1075, %v1067
    %v1141 = vsel %vm789, %v905, 0
    %1143 = vmatprep.subr.bf16.mxu0 %v1077
    %1144 = vmatpush1.bf16.msra.mxu0 %v1076
    %1145 = vmatprep.subr.bf16.mxu0 %v1085
    %1146 = vmatpush1.bf16.msra.mxu0 %v1084
    %1147 = vmatprep.subr.bf16.mxu0 %v1093
    %1148 = vmatpush1.bf16.msra.mxu0 %v1092
    %1149 = vmatprep.subr.bf16.mxu0 %v1101
    %1150 = vmatpush1.bf16.msra.mxu0 %v1100
    %1151 = vmatprep.subr.bf16.mxu0 0
    %1152 = vmatpush1.bf16.msra.mxu0 0
    %1153 = vmatprep.subr.bf16.mxu0 0
    %1154 = vmatpush1.bf16.msra.mxu0 0
    %1155 = vmatprep.subr.bf16.mxu0 0
    %1156 = vmatpush1.bf16.msra.mxu0 0
    %1157 = vmatprep.subr.bf16.mxu0 0
    %1158 = vmatpush1.bf16.msra.mxu0 0
    %1159 = vmatprep.subr.bf16.mxu0 0
    %1160 = vmatpush1.bf16.msra.mxu0 0
    %1161 = vmatprep.subr.bf16.mxu0 0
    %1162 = vmatpush1.bf16.msra.mxu0 0
    %1163 = vmatprep.subr.bf16.mxu0 0
    %1164 = vmatpush1.bf16.msra.mxu0 0
    %1165 = vmatprep.subr.bf16.mxu0 0
    %1166 = vmatpush1.bf16.msra.mxu0 0
    %1167 = vmatprep.subr.bf16.mxu0 0
    %1168 = vmatpush1.bf16.msra.mxu0 0
    %1169 = vmatprep.subr.bf16.mxu0 0
    %1170 = vmatpush1.bf16.msra.mxu0 0
    %1171 = vmatprep.subr.bf16.mxu0 0
    %1172 = vmatpush1.bf16.msra.mxu0 0
    %1173 = vmatprep.subr.bf16.mxu0 0
    %1174 = vmatpush1.bf16.msra.mxu0 0
    %1175 = vmatprep.mubr.bf16.mxu0 0
    %1176 = vmatmul.mubr.bf16.gmra.mrb[0].mxu0 %v1141
    %v1177 = vpop.f32.mrb[0].mxu0
    %v1178 = vadd.f32 %v943, %v1177
    %v1179 = vpop.f32.mrb[0].mxu0
    %v1180 = vadd.f32 %v947, %v1179
    %v1181 = vpop.f32.mrb[0].mxu0
    %v1182 = vpop.f32.mrb[0].mxu0
    %1183 = vdwg.mxu0
    %1184 = vmatprep.subr.bf16.mxu0 %v1079
    %1185 = vmatpush1.bf16.msra.mxu0 %v1078
    %1186 = vmatprep.subr.bf16.mxu0 %v1087
    %1187 = vmatpush1.bf16.msra.mxu0 %v1086
    %1188 = vmatprep.subr.bf16.mxu0 %v1095
    %1189 = vmatpush1.bf16.msra.mxu0 %v1094
    %1190 = vmatprep.subr.bf16.mxu0 %v1103
    %1191 = vmatpush1.bf16.msra.mxu0 %v1102
    %1192 = vmatprep.subr.bf16.mxu0 0
    %1193 = vmatpush1.bf16.msra.mxu0 0
    %1194 = vmatprep.subr.bf16.mxu0 0
    %1195 = vmatpush1.bf16.msra.mxu0 0
    %1196 = vmatprep.subr.bf16.mxu0 0
    %1197 = vmatpush1.bf16.msra.mxu0 0
    %1198 = vmatprep.subr.bf16.mxu0 0
    %1199 = vmatpush1.bf16.msra.mxu0 0
    %1200 = vmatprep.subr.bf16.mxu0 0
    %1201 = vmatpush1.bf16.msra.mxu0 0
    %1202 = vmatprep.subr.bf16.mxu0 0
    %1203 = vmatpush1.bf16.msra.mxu0 0
    %1204 = vmatprep.subr.bf16.mxu0 0
    %1205 = vmatpush1.bf16.msra.mxu0 0
    %1206 = vmatprep.subr.bf16.mxu0 0
    %1207 = vmatpush1.bf16.msra.mxu0 0
    %1208 = vmatprep.subr.bf16.mxu0 0
    %1209 = vmatpush1.bf16.msra.mxu0 0
    %1210 = vmatprep.subr.bf16.mxu0 0
    %1211 = vmatpush1.bf16.msra.mxu0 0
    %1212 = vmatprep.subr.bf16.mxu0 0
    %1213 = vmatpush1.bf16.msra.mxu0 0
    %1214 = vmatprep.subr.bf16.mxu0 0
    %1215 = vmatpush1.bf16.msra.mxu0 0
    %1216 = vmatprep.mubr.bf16.mxu0 0
    %1217 = vmatmul.mubr.bf16.gmra.mrb[0].mxu0 %v1141
    %v1218 = vpop.f32.mrb[0].mxu0
    %v1219 = vadd.f32 %v951, %v1218
    %v1220 = vpop.f32.mrb[0].mxu0
    %v1221 = vadd.f32 %v955, %v1220
    %v1222 = vpop.f32.mrb[0].mxu0
    %v1223 = vpop.f32.mrb[0].mxu0
    %1224 = vdwg.mxu0
    %1225 = vmatprep.subr.bf16.mxu0 %v1081
    %1226 = vmatpush1.bf16.msra.mxu0 %v1080
    %1227 = vmatprep.subr.bf16.mxu0 %v1089
    %1228 = vmatpush1.bf16.msra.mxu0 %v1088
    %1229 = vmatprep.subr.bf16.mxu0 %v1097
    %1230 = vmatpush1.bf16.msra.mxu0 %v1096
    %1231 = vmatprep.subr.bf16.mxu0 %v1105
    %1232 = vmatpush1.bf16.msra.mxu0 %v1104
    %1233 = vmatprep.subr.bf16.mxu0 0
    %1234 = vmatpush1.bf16.msra.mxu0 0
    %1235 = vmatprep.subr.bf16.mxu0 0
    %1236 = vmatpush1.bf16.msra.mxu0 0
    %1237 = vmatprep.subr.bf16.mxu0 0
    %1238 = vmatpush1.bf16.msra.mxu0 0
    %1239 = vmatprep.subr.bf16.mxu0 0
    %1240 = vmatpush1.bf16.msra.mxu0 0
    %1241 = vmatprep.subr.bf16.mxu0 0
    %1242 = vmatpush1.bf16.msra.mxu0 0
    %1243 = vmatprep.subr.bf16.mxu0 0
    %1244 = vmatpush1.bf16.msra.mxu0 0
    %1245 = vmatprep.subr.bf16.mxu0 0
    %1246 = vmatpush1.bf16.msra.mxu0 0
    %1247 = vmatprep.subr.bf16.mxu0 0
    %1248 = vmatpush1.bf16.msra.mxu0 0
    %1249 = vmatprep.subr.bf16.mxu0 0
    %1250 = vmatpush1.bf16.msra.mxu0 0
    %1251 = vmatprep.subr.bf16.mxu0 0
    %1252 = vmatpush1.bf16.msra.mxu0 0
    %1253 = vmatprep.subr.bf16.mxu0 0
    %1254 = vmatpush1.bf16.msra.mxu0 0
    %1255 = vmatprep.subr.bf16.mxu0 0
    %1256 = vmatpush1.bf16.msra.mxu0 0
    %1257 = vmatprep.mubr.bf16.mxu0 0
    %1258 = vmatmul.mubr.bf16.gmra.mrb[0].mxu0 %v1141
    %v1259 = vpop.f32.mrb[0].mxu0
    %v1260 = vadd.f32 %v959, %v1259
    %v1261 = vpop.f32.mrb[0].mxu0
    %v1262 = vadd.f32 %v963, %v1261
    %v1263 = vpop.f32.mrb[0].mxu0
    %v1264 = vpop.f32.mrb[0].mxu0
    %1265 = vdwg.mxu0
    %1266 = vmatprep.subr.bf16.mxu0 %v1083
    %1267 = vmatpush1.bf16.msra.mxu0 %v1082
    %1268 = vmatprep.subr.bf16.mxu0 %v1091
    %1269 = vmatpush1.bf16.msra.mxu0 %v1090
    %1270 = vmatprep.subr.bf16.mxu0 %v1099
    %1271 = vmatpush1.bf16.msra.mxu0 %v1098
    %1272 = vmatprep.subr.bf16.mxu0 %v1107
    %1273 = vmatpush1.bf16.msra.mxu0 %v1106
    %1274 = vmatprep.subr.bf16.mxu0 0
    %1275 = vmatpush1.bf16.msra.mxu0 0
    %1276 = vmatprep.subr.bf16.mxu0 0
    %1277 = vmatpush1.bf16.msra.mxu0 0
    %1278 = vmatprep.subr.bf16.mxu0 0
    %1279 = vmatpush1.bf16.msra.mxu0 0
    %1280 = vmatprep.subr.bf16.mxu0 0
    %1281 = vmatpush1.bf16.msra.mxu0 0
    %1282 = vmatprep.subr.bf16.mxu0 0
    %1283 = vmatpush1.bf16.msra.mxu0 0
    %1284 = vmatprep.subr.bf16.mxu0 0
    %1285 = vmatpush1.bf16.msra.mxu0 0
    %1286 = vmatprep.subr.bf16.mxu0 0
    %1287 = vmatpush1.bf16.msra.mxu0 0
    %1288 = vmatprep.subr.bf16.mxu0 0
    %1289 = vmatpush1.bf16.msra.mxu0 0
    %1290 = vmatprep.subr.bf16.mxu0 0
    %1291 = vmatpush1.bf16.msra.mxu0 0
    %1292 = vmatprep.subr.bf16.mxu0 0
    %1293 = vmatpush1.bf16.msra.mxu0 0
    %1294 = vmatprep.subr.bf16.mxu0 0
    %1295 = vmatpush1.bf16.msra.mxu0 0
    %1296 = vmatprep.subr.bf16.mxu0 0
    %1297 = vmatpush1.bf16.msra.mxu0 0
    %1298 = vmatprep.mubr.bf16.mxu0 0
    %1299 = vmatmul.mubr.bf16.gmra.mrb[0].mxu0 %v1141
    %v1300 = vpop.f32.mrb[0].mxu0
    %v1301 = vadd.f32 %v967, %v1300
    %v1302 = vpop.f32.mrb[0].mxu0
    %v1303 = vadd.f32 %v971, %v1302
    %v1304 = vpop.f32.mrb[0].mxu0
    %v1305 = vpop.f32.mrb[0].mxu0
    %1306 = vdwg.mxu0
    %v1307 = vld [vmem:[%s10] sm:$0xff]
    %1309 = vset.pattern.permute.xlu0 0
    %1310 = vperm.xlu0 %1309, %v846
    %v1311 = vpop.permute.xlu0 %1310
    %v1313 = vlaneseq
    %v1314 = vshrl.u32 %v1313, 7
    %v1315 = vsub.s32 0, %v1314
    %v1316 = vrot.slane %v1307, %v1315
    %v1317 = vsub.f32 %v1311, %v1316
    %v1318 = vmul.f32 %v1317, %v1317
    %v1319 = vadd.f32 %v1318, 0.0
    %1320 = vset.pattern.permute.xlu0 1
    %1321 = vperm.xlu0 %1320, %v846
    %v1322 = vpop.permute.xlu0 %1321
    %v1324 = vlaneseq
    %v1325 = vshrl.u32 %v1324, 7
    %v1326 = vsub.s32 1, %v1325
    %v1327 = vrot.slane %v1307, %v1326
    %v1328 = vsub.f32 %v1322, %v1327
    %v1329 = vmul.f32 %v1328, %v1328
    %v1330 = vadd.f32 %v1319, %v1329
    %1331 = vset.pattern.permute.xlu0 2
    %1332 = vperm.xlu0 %1331, %v846
    %v1333 = vpop.permute.xlu0 %1332
    %v1335 = vlaneseq
    %v1336 = vshrl.u32 %v1335, 7
    %v1337 = vsub.s32 2, %v1336
    %v1338 = vrot.slane %v1307, %v1337
    %v1339 = vsub.f32 %v1333, %v1338
    %v1340 = vmul.f32 %v1339, %v1339
    %v1341 = vadd.f32 %v1330, %v1340
    %1342 = vset.pattern.permute.xlu0 3
    %1343 = vperm.xlu0 %1342, %v846
    %v1344 = vpop.permute.xlu0 %1343
    %v1346 = vlaneseq
    %v1347 = vshrl.u32 %v1346, 7
    %v1348 = vsub.s32 3, %v1347
    %v1349 = vrot.slane %v1307, %v1348
    %v1350 = vsub.f32 %v1344, %v1349
    %v1351 = vmul.f32 %v1350, %v1350
    %v1352 = vadd.f32 %v1341, %v1351
    %1353 = vset.pattern.permute.xlu0 4
    %1354 = vperm.xlu0 %1353, %v846
    %v1355 = vpop.permute.xlu0 %1354
    %v1357 = vlaneseq
    %v1358 = vshrl.u32 %v1357, 7
    %v1359 = vsub.s32 4, %v1358
    %v1360 = vrot.slane %v1307, %v1359
    %v1361 = vsub.f32 %v1355, %v1360
    %v1362 = vmul.f32 %v1361, %v1361
    %v1363 = vadd.f32 %v1352, %v1362
    %1364 = vset.pattern.permute.xlu0 5
    %1365 = vperm.xlu0 %1364, %v846
    %v1366 = vpop.permute.xlu0 %1365
    %v1368 = vlaneseq
    %v1369 = vshrl.u32 %v1368, 7
    %v1370 = vsub.s32 5, %v1369
    %v1371 = vrot.slane %v1307, %v1370
    %v1372 = vsub.f32 %v1366, %v1371
    %v1373 = vmul.f32 %v1372, %v1372
    %v1374 = vadd.f32 %v1363, %v1373
    %1375 = vset.pattern.permute.xlu0 6
    %1376 = vperm.xlu0 %1375, %v846
    %v1377 = vpop.permute.xlu0 %1376
    %v1379 = vlaneseq
    %v1380 = vshrl.u32 %v1379, 7
    %v1381 = vsub.s32 6, %v1380
    %v1382 = vrot.slane %v1307, %v1381
    %v1383 = vsub.f32 %v1377, %v1382
    %v1384 = vmul.f32 %v1383, %v1383
    %v1385 = vadd.f32 %v1374, %v1384
    %1386 = vset.pattern.permute.xlu0 7
    %1387 = vperm.xlu0 %1386, %v846
    %v1388 = vpop.permute.xlu0 %1387
    %v1390 = vlaneseq
    %v1391 = vshrl.u32 %v1390, 7
    %v1392 = vsub.s32 7, %v1391
    %v1393 = vrot.slane %v1307, %v1392
    %v1394 = vsub.f32 %v1388, %v1393
    %v1395 = vmul.f32 %v1394, %v1394
    %v1396 = vadd.f32 %v1385, %v1395
    %v1397 = vld [vmem:[%s11] sm:$0x1]
    %v1398 = vsub.f32 0.0, %v1397
    %v1400 = vlaneseq
    %v1401 = vshrl.u32 %v1400, 7
    %v1402 = vsub.s32 0, %v1401
    %v1403 = vrot.slane %v1398, %v1402
    %v1405 = vmul.f32 %v1403, %v1396
    %v1406 = vmul.f32 %v1405, 1.442695
    %v1407 = vpow.pop %v1406
    %v1408 = vpack.c.bf16 %v1407, %v1407
    %v1409 = vld [vmem:[%s12] sm:$0xff]
    %v1410 = vld [vmem:[%s12 + $0x8] sm:$0xff]
    %v1411 = vld [vmem:[%s12 + $0x10] sm:$0xff]
    %v1412 = vld [vmem:[%s12 + $0x18] sm:$0xff]
    %v1413 = vld [vmem:[%s12 + $0x20] sm:$0xff]
    %v1414 = vld [vmem:[%s12 + $0x28] sm:$0xff]
    %v1415 = vld [vmem:[%s12 + $0x30] sm:$0xff]
    %v1416 = vld [vmem:[%s12 + $0x38] sm:$0xff]
    %v1417 = vld [vmem:[%s13] sm:$0xff]
    %v1419 = vlaneseq
    %v1420 = vshrl.u32 %v1419, 7
    %v1421 = vsub.s32 0, %v1420
    %v1422 = vrot.slane %v1417, %v1421
    %v1423 = vlaneseq
    %v1424 = vshrl.u32 %v1423, 7
    %v1425 = vsub.s32 1, %v1424
    %v1426 = vrot.slane %v1417, %v1425
    %v1427 = vlaneseq
    %v1428 = vshrl.u32 %v1427, 7
    %v1429 = vsub.s32 2, %v1428
    %v1430 = vrot.slane %v1417, %v1429
    %v1431 = vlaneseq
    %v1432 = vshrl.u32 %v1431, 7
    %v1433 = vsub.s32 3, %v1432
    %v1434 = vrot.slane %v1417, %v1433
    %v1435 = vlaneseq
    %v1436 = vshrl.u32 %v1435, 7
    %v1437 = vsub.s32 4, %v1436
    %v1438 = vrot.slane %v1417, %v1437
    %v1439 = vlaneseq
    %v1440 = vshrl.u32 %v1439, 7
    %v1441 = vsub.s32 5, %v1440
    %v1442 = vrot.slane %v1417, %v1441
    %v1443 = vlaneseq
    %v1444 = vshrl.u32 %v1443, 7
    %v1445 = vsub.s32 6, %v1444
    %v1446 = vrot.slane %v1417, %v1445
    %v1447 = vlaneseq
    %v1448 = vshrl.u32 %v1447, 7
    %v1449 = vsub.s32 7, %v1448
    %v1450 = vrot.slane %v1417, %v1449
    %v1467 = vunpack.c.l.b16 %v1409
    %v1468 = vunpack.c.h.b16 %v1409
    %v1469 = vunpack.c.l.b16 %v1410
    %v1470 = vunpack.c.h.b16 %v1410
    %v1471 = vunpack.c.l.b16 %v1411
    %v1472 = vunpack.c.h.b16 %v1411
    %v1473 = vunpack.c.l.b16 %v1412
    %v1474 = vunpack.c.h.b16 %v1412
    %v1475 = vunpack.c.l.b16 %v1413
    %v1476 = vunpack.c.h.b16 %v1413
    %v1477 = vunpack.c.l.b16 %v1414
    %v1478 = vunpack.c.h.b16 %v1414
    %v1479 = vunpack.c.l.b16 %v1415
    %v1480 = vunpack.c.h.b16 %v1415
    %v1481 = vunpack.c.l.b16 %v1416
    %v1482 = vunpack.c.h.b16 %v1416
    %v1483 = vpack.c.b16 %v1475, %v1467
    %v1484 = vpack.c.b16 %v1476, %v1468
    %v1485 = vpack.c.b16 %v1477, %v1469
    %v1486 = vpack.c.b16 %v1478, %v1470
    %v1487 = vpack.c.b16 %v1479, %v1471
    %v1488 = vpack.c.b16 %v1480, %v1472
    %v1489 = vpack.c.b16 %v1481, %v1473
    %v1490 = vpack.c.b16 %v1482, %v1474
    %vm1499 = vcmask 130048
    %v1501 = vsel %vm1499, %v1408, 0
    %1503 = vmatprep.subr.bf16.mxu0 %v1484
    %1504 = vmatpush1.bf16.msra.mxu0 %v1483
    %1505 = vmatprep.subr.bf16.mxu0 0
    %1506 = vmatpush1.bf16.msra.mxu0 0
    %1507 = vmatprep.subr.bf16.mxu0 0
    %1508 = vmatpush1.bf16.msra.mxu0 0
    %1509 = vmatprep.subr.bf16.mxu0 0
    %1510 = vmatpush1.bf16.msra.mxu0 0
    %1511 = vmatprep.subr.bf16.mxu0 0
    %1512 = vmatpush1.bf16.msra.mxu0 0
    %1513 = vmatprep.subr.bf16.mxu0 0
    %1514 = vmatpush1.bf16.msra.mxu0 0
    %1515 = vmatprep.subr.bf16.mxu0 0
    %1516 = vmatpush1.bf16.msra.mxu0 0
    %1517 = vmatprep.subr.bf16.mxu0 0
    %1518 = vmatpush1.bf16.msra.mxu0 0
    %1519 = vmatprep.subr.bf16.mxu0 0
    %1520 = vmatpush1.bf16.msra.mxu0 0
    %1521 = vmatprep.subr.bf16.mxu0 0
    %1522 = vmatpush1.bf16.msra.mxu0 0
    %1523 = vmatprep.subr.bf16.mxu0 0
    %1524 = vmatpush1.bf16.msra.mxu0 0
    %1525 = vmatprep.subr.bf16.mxu0 0
    %1526 = vmatpush1.bf16.msra.mxu0 0
    %1527 = vmatprep.subr.bf16.mxu0 0
    %1528 = vmatpush1.bf16.msra.mxu0 0
    %1529 = vmatprep.subr.bf16.mxu0 0
    %1530 = vmatpush1.bf16.msra.mxu0 0
    %1531 = vmatprep.subr.bf16.mxu0 0
    %1532 = vmatpush1.bf16.msra.mxu0 0
    %1533 = vmatprep.subr.bf16.mxu0 0
    %1534 = vmatpush1.bf16.msra.mxu0 0
    %1535 = vmatprep.mubr.bf16.mxu0 0
    %1536 = vmatmul.mubr.bf16.gmra.mrb[0].mxu0 %v1501
    %v1537 = vpop.f32.mrb[0].mxu0
    %v1538 = vadd.f32 %v1422, %v1537
    %v1539 = vpop.f32.mrb[0].mxu0
    %v1540 = vadd.f32 %v1426, %v1539
    %v1541 = vpop.f32.mrb[0].mxu0
    %v1542 = vpop.f32.mrb[0].mxu0
    %1543 = vdwg.mxu0
    %1544 = vmatprep.subr.bf16.mxu0 %v1486
    %1545 = vmatpush1.bf16.msra.mxu0 %v1485
    %1546 = vmatprep.subr.bf16.mxu0 0
    %1547 = vmatpush1.bf16.msra.mxu0 0
    %1548 = vmatprep.subr.bf16.mxu0 0
    %1549 = vmatpush1.bf16.msra.mxu0 0
    %1550 = vmatprep.subr.bf16.mxu0 0
    %1551 = vmatpush1.bf16.msra.mxu0 0
    %1552 = vmatprep.subr.bf16.mxu0 0
    %1553 = vmatpush1.bf16.msra.mxu0 0
    %1554 = vmatprep.subr.bf16.mxu0 0
    %1555 = vmatpush1.bf16.msra.mxu0 0
    %1556 = vmatprep.subr.bf16.mxu0 0
    %1557 = vmatpush1.bf16.msra.mxu0 0
    %1558 = vmatprep.subr.bf16.mxu0 0
    %1559 = vmatpush1.bf16.msra.mxu0 0
    %1560 = vmatprep.subr.bf16.mxu0 0
    %1561 = vmatpush1.bf16.msra.mxu0 0
    %1562 = vmatprep.subr.bf16.mxu0 0
    %1563 = vmatpush1.bf16.msra.mxu0 0
    %1564 = vmatprep.subr.bf16.mxu0 0
    %1565 = vmatpush1.bf16.msra.mxu0 0
    %1566 = vmatprep.subr.bf16.mxu0 0
    %1567 = vmatpush1.bf16.msra.mxu0 0
    %1568 = vmatprep.subr.bf16.mxu0 0
    %1569 = vmatpush1.bf16.msra.mxu0 0
    %1570 = vmatprep.subr.bf16.mxu0 0
    %1571 = vmatpush1.bf16.msra.mxu0 0
    %1572 = vmatprep.subr.bf16.mxu0 0
    %1573 = vmatpush1.bf16.msra.mxu0 0
    %1574 = vmatprep.subr.bf16.mxu0 0
    %1575 = vmatpush1.bf16.msra.mxu0 0
    %1576 = vmatprep.mubr.bf16.mxu0 0
    %1577 = vmatmul.mubr.bf16.gmra.mrb[0].mxu0 %v1501
    %v1578 = vpop.f32.mrb[0].mxu0
    %v1579 = vadd.f32 %v1430, %v1578
    %v1580 = vpop.f32.mrb[0].mxu0
    %v1581 = vadd.f32 %v1434, %v1580
    %v1582 = vpop.f32.mrb[0].mxu0
    %v1583 = vpop.f32.mrb[0].mxu0
    %1584 = vdwg.mxu0
    %1585 = vmatprep.subr.bf16.mxu0 %v1488
    %1586 = vmatpush1.bf16.msra.mxu0 %v1487
    %1587 = vmatprep.subr.bf16.mxu0 0
    %1588 = vmatpush1.bf16.msra.mxu0 0
    %1589 = vmatprep.subr.bf16.mxu0 0
    %1590 = vmatpush1.bf16.msra.mxu0 0
    %1591 = vmatprep.subr.bf16.mxu0 0
    %1592 = vmatpush1.bf16.msra.mxu0 0
    %1593 = vmatprep.subr.bf16.mxu0 0
    %1594 = vmatpush1.bf16.msra.mxu0 0
    %1595 = vmatprep.subr.bf16.mxu0 0
    %1596 = vmatpush1.bf16.msra.mxu0 0
    %1597 = vmatprep.subr.bf16.mxu0 0
    %1598 = vmatpush1.bf16.msra.mxu0 0
    %1599 = vmatprep.subr.bf16.mxu0 0
    %1600 = vmatpush1.bf16.msra.mxu0 0
    %1601 = vmatprep.subr.bf16.mxu0 0
    %1602 = vmatpush1.bf16.msra.mxu0 0
    %1603 = vmatprep.subr.bf16.mxu0 0
    %1604 = vmatpush1.bf16.msra.mxu0 0
    %1605 = vmatprep.subr.bf16.mxu0 0
    %1606 = vmatpush1.bf16.msra.mxu0 0
    %1607 = vmatprep.subr.bf16.mxu0 0
    %1608 = vmatpush1.bf16.msra.mxu0 0
    %1609 = vmatprep.subr.bf16.mxu0 0
    %1610 = vmatpush1.bf16.msra.mxu0 0
    %1611 = vmatprep.subr.bf16.mxu0 0
    %1612 = vmatpush1.bf16.msra.mxu0 0
    %1613 = vmatprep.subr.bf16.mxu0 0
    %1614 = vmatpush1.bf16.msra.mxu0 0
    %1615 = vmatprep.subr.bf16.mxu0 0
    %1616 = vmatpush1.bf16.msra.mxu0 0
    %1617 = vmatprep.mubr.bf16.mxu0 0
    %1618 = vmatmul.mubr.bf16.gmra.mrb[0].mxu0 %v1501
    %v1619 = vpop.f32.mrb[0].mxu0
    %v1620 = vadd.f32 %v1438, %v1619
    %v1621 = vpop.f32.mrb[0].mxu0
    %v1622 = vadd.f32 %v1442, %v1621
    %v1623 = vpop.f32.mrb[0].mxu0
    %v1624 = vpop.f32.mrb[0].mxu0
    %1625 = vdwg.mxu0
    %1626 = vmatprep.subr.bf16.mxu0 %v1490
    %1627 = vmatpush1.bf16.msra.mxu0 %v1489
    %1628 = vmatprep.subr.bf16.mxu0 0
    %1629 = vmatpush1.bf16.msra.mxu0 0
    %1630 = vmatprep.subr.bf16.mxu0 0
    %1631 = vmatpush1.bf16.msra.mxu0 0
    %1632 = vmatprep.subr.bf16.mxu0 0
    %1633 = vmatpush1.bf16.msra.mxu0 0
    %1634 = vmatprep.subr.bf16.mxu0 0
    %1635 = vmatpush1.bf16.msra.mxu0 0
    %1636 = vmatprep.subr.bf16.mxu0 0
    %1637 = vmatpush1.bf16.msra.mxu0 0
    %1638 = vmatprep.subr.bf16.mxu0 0
    %1639 = vmatpush1.bf16.msra.mxu0 0
    %1640 = vmatprep.subr.bf16.mxu0 0
    %1641 = vmatpush1.bf16.msra.mxu0 0
    %1642 = vmatprep.subr.bf16.mxu0 0
    %1643 = vmatpush1.bf16.msra.mxu0 0
    %1644 = vmatprep.subr.bf16.mxu0 0
    %1645 = vmatpush1.bf16.msra.mxu0 0
    %1646 = vmatprep.subr.bf16.mxu0 0
    %1647 = vmatpush1.bf16.msra.mxu0 0
    %1648 = vmatprep.subr.bf16.mxu0 0
    %1649 = vmatpush1.bf16.msra.mxu0 0
    %1650 = vmatprep.subr.bf16.mxu0 0
    %1651 = vmatpush1.bf16.msra.mxu0 0
    %1652 = vmatprep.subr.bf16.mxu0 0
    %1653 = vmatpush1.bf16.msra.mxu0 0
    %1654 = vmatprep.subr.bf16.mxu0 0
    %1655 = vmatpush1.bf16.msra.mxu0 0
    %1656 = vmatprep.subr.bf16.mxu0 0
    %1657 = vmatpush1.bf16.msra.mxu0 0
    %1658 = vmatprep.mubr.bf16.mxu0 0
    %1659 = vmatmul.mubr.bf16.gmra.mrb[0].mxu0 %v1501
    %v1660 = vpop.f32.mrb[0].mxu0
    %v1661 = vadd.f32 %v1446, %v1660
    %v1662 = vpop.f32.mrb[0].mxu0
    %v1663 = vadd.f32 %v1450, %v1662
    %v1664 = vpop.f32.mrb[0].mxu0
    %v1665 = vpop.f32.mrb[0].mxu0
    %1666 = vdwg.mxu0
    %1667 = vst [vmem:[#allocation2] sm:$0xff] %v1178
    %1668 = vst [vmem:[#allocation2 + $0x8] sm:$0xff] %v1180
    %1669 = vst [vmem:[#allocation2 + $0x10] sm:$0xff] %v1219
    %1670 = vst [vmem:[#allocation2 + $0x18] sm:$0xff] %v1221
    %1671 = vst [vmem:[#allocation2 + $0x20] sm:$0xff] %v1260
    %1672 = vst [vmem:[#allocation2 + $0x28] sm:$0xff] %v1262
    %1673 = vst [vmem:[#allocation2 + $0x30] sm:$0xff] %v1301
    %1674 = vst [vmem:[#allocation2 + $0x38] sm:$0xff] %v1303
    %1675 = vst [vmem:[#allocation4] sm:$0xff] %v1538
    %1676 = vst [vmem:[#allocation4 + $0x8] sm:$0xff] %v1540
    %1677 = vst [vmem:[#allocation4 + $0x10] sm:$0xff] %v1579
    %1678 = vst [vmem:[#allocation4 + $0x18] sm:$0xff] %v1581
    %1679 = vst [vmem:[#allocation4 + $0x20] sm:$0xff] %v1620
    %1680 = vst [vmem:[#allocation4 + $0x28] sm:$0xff] %v1622
    %1681 = vst [vmem:[#allocation4 + $0x30] sm:$0xff] %v1661
    %1682 = vst [vmem:[#allocation4 + $0x38] sm:$0xff] %v1663
    %1684 = vrot.lane.b32.xlu0 %v828, 8
    %v1685 = vpop.permute.xlu0 %1684
    %v1687 = vsel %vm856, %v846, %v1685
    %vm1688 = vcmask 195584
    %v1689 = vsel %vm1688, %v1687, 0.0
    %1690 = vst [vmem:[#allocation6] sm:$0xff] %v1689
    // Predicated region
    $region58: #{tpu_custom_call.1} parent=1 // pred_check
      _
    $region59: #{tpu_custom_call.1} parent=1 // pred_check_branch
      %1692 = sbr.rel (0) target = $region61
    $region60: #{tpu_custom_call.1} parent=1 // pred_region
      %s1694 = ssub.s32 1024, 1024
      %1695 = vsyncadd [#allocation3], %s1694
      %s1697 = sshll.u32 [#allocation2], 4
      %s1698 = int_to_ptr.vmem [resolvable:$true] %s1697
      %1700 = dma.vmem_to_hbm [thread:$0]  %s1698, 1024, %s14, [#allocation3]
    $region61: #{tpu_custom_call.1} parent=1 // pred_fallthru
      _
    // Predicated region
    $region62: #{tpu_custom_call.1} parent=1 // pred_check
      _
    $region63: #{tpu_custom_call.1} parent=1 // pred_check_branch
      %1702 = sbr.rel (0) target = $region65
    $region64: #{tpu_custom_call.1} parent=1 // pred_region
      %s1704 = ssub.s32 1024, 1024
      %1705 = vsyncadd [#allocation5], %s1704
      %s1707 = sshll.u32 [#allocation4], 4
      %s1708 = int_to_ptr.vmem [resolvable:$true] %s1707
      %1710 = dma.vmem_to_hbm [thread:$0]  %s1708, 1024, %s15, [#allocation5]
    $region65: #{tpu_custom_call.1} parent=1 // pred_fallthru
      _
    // Predicated region
    $region66: #{tpu_custom_call.1} parent=1 // pred_check
      _
    $region67: #{tpu_custom_call.1} parent=1 // pred_check_branch
      %1712 = sbr.rel (0) target = $region69
    $region68: #{tpu_custom_call.1} parent=1 // pred_region
      %s1714 = ssub.s32 128, 128
      %1715 = vsyncadd [#allocation5], %s1714
      %s1717 = sshll.u32 [#allocation6], 4
      %s1718 = int_to_ptr.vmem [resolvable:$true] %s1717
      %1720 = dma.vmem_to_hbm [thread:$0]  %s1718, 128, %s16, [#allocation5]
    $region69: #{tpu_custom_call.1} parent=1 // pred_fallthru
      _
    // Predicated region
    $region70: #{tpu_custom_call.1} parent=1 // pred_check
      _
    $region71: #{tpu_custom_call.1} parent=1 // pred_check_branch
      %1722 = sbr.rel (0) target = $region73
    $region72: #{tpu_custom_call.1} parent=1 // pred_region
      %1723 = dma.done [#allocation3], 1024
    $region73: #{tpu_custom_call.1} parent=1 // pred_fallthru
      _
    // Predicated region
    $region74: #{tpu_custom_call.1} parent=1 // pred_check
      _
    $region75: #{tpu_custom_call.1} parent=1 // pred_check_branch
      %1725 = sbr.rel (0) target = $region77
    $region76: #{tpu_custom_call.1} parent=1 // pred_region
      %1726 = dma.done [#allocation5], 1024
    $region77: #{tpu_custom_call.1} parent=1 // pred_fallthru
      _
    // Predicated region
    $region78: #{tpu_custom_call.1} parent=1 // pred_check
      _
    $region79: #{tpu_custom_call.1} parent=1 // pred_check_branch
      %1728 = sbr.rel (0) target = $region81
    $region80: #{tpu_custom_call.1} parent=1 // pred_region
      %1729 = dma.done [#allocation5], 128
    $region81: #{tpu_custom_call.1} parent=1 // pred_fallthru
      _
    %1730 = vsyncpa [#allocation3], 1
    %1731 = vsyncpa [#allocation5], 1

</llo_original>
